<compile_context>
chip_gen: v7x
topology: tpu7x:2x2x1
jax: 0.10.0
libtpu: 0.0.40
codegen_flags: <defaults>
</compile_context>

<pallas_src>
import jax
import jax.numpy as jnp
from jax.experimental import pallas as pl
from jax.experimental.pallas import tpu as pltpu

# ----------------------- model constants (from the module) ------------------
C_IN = 3
H_IN = W_IN = 32               # implied by fc1.in_features = 16*5*5
K1 = 5                         # both conv kernels are 5x5
C1, C2 = 6, 16
H1 = W1 = H_IN - K1 + 1        # 28 after conv1
HP1 = WP1 = H1 // 2            # 14 after pool1
H2 = W2 = HP1 - K1 + 1         # 10 after conv2
HP2 = WP2 = H2 // 2            # 5  after pool2
K_FC = C2 * HP2 * WP2          # 400
HID1, HID2, HID3 = 120, 84, 25
FINAL_SIZE = 2


# ----------------------- fused conv + bias + relu + 2x2 maxpool --------------
def _conv_relu_pool_kernel(p_ref, w_ref, b_ref, o_ref):
    # p_ref: (1, 4, Mp, K)  -- leading "4" indexes the 2x2 pool-window tap
    #                          (dh*2+dw); rows of each slab are the pooled
    #                          output positions in (ho, wo) row-major order.
    # w_ref: (K, Cout); b_ref: (1, Cout); o_ref: (1, Mp, Cout)
    w = w_ref[...]
    b = b_ref[...]

    def tap(i):
        acc = jnp.dot(p_ref[0, i], w, preferred_element_type=jnp.float32)
        return jnp.maximum(acc + b, 0.0)

    o_ref[0] = jnp.maximum(jnp.maximum(tap(0), tap(1)),
                           jnp.maximum(tap(2), tap(3)))


def conv_relu_pool(patches, w_mat, b_row):
    B, _, mp, k = patches.shape
    _, cout = w_mat.shape
    return pl.pallas_call(
        _conv_relu_pool_kernel,
        out_shape=jax.ShapeDtypeStruct((B, mp, cout), jnp.float32),
        grid=(B,),
        in_specs=[
            pl.BlockSpec((1, 4, mp, k), lambda b: (b, 0, 0, 0)),
            pl.BlockSpec((k, cout), lambda b: (0, 0)),
            pl.BlockSpec((1, cout), lambda b: (0, 0)),
        ],
        out_specs=pl.BlockSpec((1, mp, cout), lambda b: (b, 0, 0)),
        compiler_params=pltpu.CompilerParams(
            dimension_semantics=("parallel",)),
    )(patches, w_mat, b_row)


# ----------------------- fused fc1/relu/fc2/relu/fc3/relu/fc4 ----------------
def _fc_kernel(a_ref, w1, b1, w2, b2, w3, b3, w4, b4, o_ref):
    h = jnp.maximum(
        jnp.dot(a_ref[...], w1[...], preferred_element_type=jnp.float32)
        + b1[...], 0.0)
    h = jnp.maximum(
        jnp.dot(h, w2[...], preferred_element_type=jnp.float32) + b2[...], 0.0)
    h = jnp.maximum(
        jnp.dot(h, w3[...], preferred_element_type=jnp.float32) + b3[...], 0.0)
    o_ref[...] = (jnp.dot(h, w4[...], preferred_element_type=jnp.float32)
                  + b4[...])


def fc_stack(a, w1, b1, w2, b2, w3, b3, w4, b4):
    B = a.shape[0]
    n_out = w4.shape[1]
    # Everything (< 0.3 MB) fits in VMEM; single invocation, full-array blocks.
    return pl.pallas_call(
        _fc_kernel,
        out_shape=jax.ShapeDtypeStruct((B, n_out), jnp.float32),
    )(a, w1, b1, w2, b2, w3, b3, w4, b4)


# ----------------------- im2col glue (pool-window-major rows) ----------------
def _im2col_pooled(x_nhwc, k, h_out, w_out):
    """(B,H,W,C) -> (B, 4, (h_out//2)*(w_out//2), k*k*C) patches.

    Feature order is (kh, kw, ci); dim-1 index is dh*2+dw of the 2x2 pool
    window; dim-2 rows are pooled positions (ho, wo) row-major.
    """
    B = x_nhwc.shape[0]
    c = x_nhwc.shape[-1]
    cols = [x_nhwc[:, kh:kh + h_out, kw:kw + w_out, :]
            for kh in range(k) for kw in range(k)]
    pat = jnp.concatenate(cols, axis=-1)                 # (B, h_out, w_out, K)
    hp, wp = h_out // 2, w_out // 2
    pat = pat.reshape(B, hp, 2, wp, 2, k * k * c)
    pat = jnp.transpose(pat, (0, 2, 4, 1, 3, 5))         # (B, 2, 2, hp, wp, K)
    return pat.reshape(B, 4, hp * wp, k * k * c)


# ----------------------- parameters ------------------------------------------
def init_params(key, final_size=FINAL_SIZE):
    """PyTorch-layout parameters: conv (co,ci,kh,kw), linear (out,in)."""
    ks = jax.random.split(key, 6)

    def xavier(k, shape, fan_in, fan_out, gain=1.0):
        std = gain * (2.0 / (fan_in + fan_out)) ** 0.5
        return std * jax.random.normal(k, shape, jnp.float32)

    return {
        "conv1_w": xavier(ks[0], (C1, C_IN, K1, K1), C_IN * K1 * K1, C1 * K1 * K1),
        "conv1_b": jnp.zeros((C1,), jnp.float32),
        "conv2_w": xavier(ks[1], (C2, C1, K1, K1), C1 * K1 * K1, C2 * K1 * K1),
        "conv2_b": jnp.zeros((C2,), jnp.float32),
        "fc1_w": xavier(ks[2], (HID1, K_FC), K_FC, HID1),
        "fc1_b": jnp.zeros((HID1,), jnp.float32),
        "fc2_w": xavier(ks[3], (HID2, HID1), HID1, HID2),
        "fc2_b": jnp.zeros((HID2,), jnp.float32),
        "fc3_w": xavier(ks[4], (HID3, HID2), HID2, HID3),
        "fc3_b": jnp.zeros((HID3,), jnp.float32),
        "fc4_w": xavier(ks[5], (final_size, HID3), HID3, final_size),
        "fc4_b": jnp.zeros((final_size,), jnp.float32),
    }


def prepare_params(tp):
    """One-time (outside jit) layout transform -> kernel-ready parameters."""
    w1c = jnp.transpose(tp["conv1_w"], (2, 3, 1, 0)).reshape(K1 * K1 * C_IN, C1)
    w2c = jnp.transpose(tp["conv2_w"], (2, 3, 1, 0)).reshape(K1 * K1 * C1, C2)
    # fc1 columns are in torch's NCHW-flatten (c,h,w) order; permute once to
    # the kernels' NHWC-flatten (h,w,c) order so the jitted forward never
    # touches the weight layout.
    wf1 = jnp.transpose(tp["fc1_w"].reshape(HID1, C2, HP2, WP2),
                        (2, 3, 1, 0)).reshape(K_FC, HID1)
    final = tp["fc4_w"].shape[0]
    return {
        "conv1_w": w1c, "conv1_b": tp["conv1_b"].reshape(1, C1),
        "conv2_w": w2c, "conv2_b": tp["conv2_b"].reshape(1, C2),
        "fc1_w": wf1, "fc1_b": tp["fc1_b"].reshape(1, HID1),
        "fc2_w": tp["fc2_w"].T, "fc2_b": tp["fc2_b"].reshape(1, HID2),
        "fc3_w": tp["fc3_w"].T, "fc3_b": tp["fc3_b"].reshape(1, HID3),
        "fc4_w": tp["fc4_w"].T, "fc4_b": tp["fc4_b"].reshape(1, final),
    }


# ----------------------- forward pass ----------------------------------------
@jax.jit
def lenet_cifar_forward(x, params):
    B = x.shape[0]
    xs = jnp.transpose(x, (0, 2, 3, 1))                       # NCHW -> NHWC

    p1 = _im2col_pooled(xs, K1, H1, W1)                       # (B, 4, 196, 75)
    a1 = conv_relu_pool(p1, params["conv1_w"], params["conv1_b"])  # (B,196,6)
    a1 = a1.reshape(B, HP1, WP1, C1)                          # (B, 14, 14, 6)

    p2 = _im2col_pooled(a1, K1, H2, W2)                       # (B, 4, 25, 150)
    a2 = conv_relu_pool(p2, params["conv2_w"], params["conv2_b"])  # (B,25,16)

    feat = a2.reshape(B, K_FC)                                # NHWC-flatten
    return fc_stack(feat,
                    params["fc1_w"], params["fc1_b"],
                    params["fc2_w"], params["fc2_b"],
                    params["fc3_w"], params["fc3_b"],
                    params["fc4_w"], params["fc4_b"])


# ----------------------- pure-JAX reference (for self-check) -----------------
def _ref_forward(x, tp):
    hp = jax.lax.Precision.HIGHEST

    def conv(h, w, b):
        y = jax.lax.conv_general_dilated(
            h, w, window_strides=(1, 1), padding="VALID",
            dimension_numbers=("NCHW", "OIHW", "NCHW"), precision=hp)
        return y + b.reshape(1, -1, 1, 1)

    def pool(h):
        return jax.lax.reduce_window(h, -jnp.inf, jax.lax.max,
                                     (1, 1, 2, 2), (1, 1, 2, 2), "VALID")

    h = pool(jnp.maximum(conv(x, tp["conv1_w"], tp["conv1_b"]), 0.0))
    h = pool(jnp.maximum(conv(h, tp["conv2_w"], tp["conv2_b"]), 0.0))
    h = h.reshape(x.shape[0], -1)
    h = jnp.maximum(jnp.dot(h, tp["fc1_w"].T, precision=hp) + tp["fc1_b"], 0.0)
    h = jnp.maximum(jnp.dot(h, tp["fc2_w"].T, precision=hp) + tp["fc2_b"], 0.0)
    h = jnp.maximum(jnp.dot(h, tp["fc3_w"].T, precision=hp) + tp["fc3_b"], 0.0)
    return jnp.dot(h, tp["fc4_w"].T, precision=hp) + tp["fc4_b"]


if __name__ == "__main__":
    key = jax.random.PRNGKey(0)
    pkey, xkey = jax.random.split(key)
    torch_params = init_params(pkey)
    params = prepare_params(torch_params)     # one-time layout prep, not jitted

    # Smallest shapes consistent with the module: fc1 expects 16*5*5 features,
    # which forces 3x32x32 (CIFAR) inputs; batch = 2.
    x = jax.random.normal(xkey, (2, C_IN, H_IN, W_IN), jnp.float32)

    out = lenet_cifar_forward(x, params)
    jax.block_until_ready(out)
    assert out.shape == (2, FINAL_SIZE) and out.dtype == jnp.float32

    ref = _ref_forward(x, torch_params)
    assert jnp.allclose(out, ref, rtol=1e-3, atol=1e-3), (
        f"mismatch: max abs err {jnp.max(jnp.abs(out - ref))}")

    print("KERNEL_OK")
</pallas_src>

<mosaic_0001>
module attributes {stable_mosaic.version = 11 : i64} {
  func.func @_conv_relu_pool_kernel(%arg0: i32, %arg1: memref<1x4x196x75xf32, #tpu.memory_space<vmem>>, %arg2: memref<75x6xf32, #tpu.memory_space<vmem>>, %arg3: memref<1x6xf32, #tpu.memory_space<vmem>>, %arg4: memref<1x196x6xf32, #tpu.memory_space<vmem>>) attributes {dimension_semantics = [#tpu.dimension_semantics<parallel>], iteration_bounds = array<i64: 2>, scalar_prefetch = 0 : i64, scratch_operands = 0 : i64, tpu.core_type = #tpu.core_type<tc>, window_params = [{transform_indices = @transform_0, window_bounds = array<i64: 1, 4, 196, 75>}, {pipeline_mode = #tpu.pipeline_mode<synchronous>, transform_indices = @transform_1, window_bounds = array<i64: 75, 6>}, {pipeline_mode = #tpu.pipeline_mode<synchronous>, transform_indices = @transform_2, window_bounds = array<i64: 1, 6>}, {transform_indices = @transform_3, window_bounds = array<i64: 1, 196, 6>}]} {
    %c0 = arith.constant 0 : index
    %c0_0 = arith.constant 0 : index
    %0 = vector.load %arg2[%c0, %c0_0] : memref<75x6xf32, #tpu.memory_space<vmem>>, vector<75x6xf32>
    %c0_1 = arith.constant 0 : index
    %c0_2 = arith.constant 0 : index
    %1 = vector.load %arg3[%c0_1, %c0_2] : memref<1x6xf32, #tpu.memory_space<vmem>>, vector<1x6xf32>
    %c0_3 = arith.constant 0 : index
    %c0_4 = arith.constant 0 : index
    %c0_5 = arith.constant 0 : index
    %c0_6 = arith.constant 0 : index
    %2 = vector.load %arg1[%c0_3, %c0_4, %c0_5, %c0_6] : memref<1x4x196x75xf32, #tpu.memory_space<vmem>>, vector<1x1x196x75xf32>
    %3 = vector.shape_cast %2 : vector<1x1x196x75xf32> to vector<196x75xf32>
    %cst = arith.constant dense<0.000000e+00> : vector<196x6xf32>
    %4 = tpu.matmul %3, %0, %cst {dimension_numbers = #tpu.dot_dimension_numbers<[1], [0], [0], [1], [0, 0, 1, 1], [], []>} : vector<196x75xf32>, vector<75x6xf32>, vector<196x6xf32> -> vector<196x6xf32>
    %5 = vector.broadcast %1 : vector<1x6xf32> to vector<196x6xf32>
    %6 = arith.addf %4, %5 : vector<196x6xf32>
    %cst_7 = arith.constant 0.000000e+00 : f32
    %7 = vector.broadcast %cst_7 : f32 to vector<196x6xf32>
    %8 = arith.maximumf %6, %7 : vector<196x6xf32>
    %c0_8 = arith.constant 0 : index
    %c1 = arith.constant 1 : index
    %c0_9 = arith.constant 0 : index
    %c0_10 = arith.constant 0 : index
    %9 = vector.load %arg1[%c0_8, %c1, %c0_9, %c0_10] : memref<1x4x196x75xf32, #tpu.memory_space<vmem>>, vector<1x1x196x75xf32>
    %10 = vector.shape_cast %9 : vector<1x1x196x75xf32> to vector<196x75xf32>
    %cst_11 = arith.constant dense<0.000000e+00> : vector<196x6xf32>
    %11 = tpu.matmul %10, %0, %cst_11 {dimension_numbers = #tpu.dot_dimension_numbers<[1], [0], [0], [1], [0, 0, 1, 1], [], []>} : vector<196x75xf32>, vector<75x6xf32>, vector<196x6xf32> -> vector<196x6xf32>
    %12 = vector.broadcast %1 : vector<1x6xf32> to vector<196x6xf32>
    %13 = arith.addf %11, %12 : vector<196x6xf32>
    %cst_12 = arith.constant 0.000000e+00 : f32
    %14 = vector.broadcast %cst_12 : f32 to vector<196x6xf32>
    %15 = arith.maximumf %13, %14 : vector<196x6xf32>
    %16 = arith.maximumf %8, %15 : vector<196x6xf32>
    %c0_13 = arith.constant 0 : index
    %c2 = arith.constant 2 : index
    %c0_14 = arith.constant 0 : index
    %c0_15 = arith.constant 0 : index
    %17 = vector.load %arg1[%c0_13, %c2, %c0_14, %c0_15] : memref<1x4x196x75xf32, #tpu.memory_space<vmem>>, vector<1x1x196x75xf32>
    %18 = vector.shape_cast %17 : vector<1x1x196x75xf32> to vector<196x75xf32>
    %cst_16 = arith.constant dense<0.000000e+00> : vector<196x6xf32>
    %19 = tpu.matmul %18, %0, %cst_16 {dimension_numbers = #tpu.dot_dimension_numbers<[1], [0], [0], [1], [0, 0, 1, 1], [], []>} : vector<196x75xf32>, vector<75x6xf32>, vector<196x6xf32> -> vector<196x6xf32>
    %20 = vector.broadcast %1 : vector<1x6xf32> to vector<196x6xf32>
    %21 = arith.addf %19, %20 : vector<196x6xf32>
    %cst_17 = arith.constant 0.000000e+00 : f32
    %22 = vector.broadcast %cst_17 : f32 to vector<196x6xf32>
    %23 = arith.maximumf %21, %22 : vector<196x6xf32>
    %c0_18 = arith.constant 0 : index
    %c3 = arith.constant 3 : index
    %c0_19 = arith.constant 0 : index
    %c0_20 = arith.constant 0 : index
    %24 = vector.load %arg1[%c0_18, %c3, %c0_19, %c0_20] : memref<1x4x196x75xf32, #tpu.memory_space<vmem>>, vector<1x1x196x75xf32>
    %25 = vector.shape_cast %24 : vector<1x1x196x75xf32> to vector<196x75xf32>
    %cst_21 = arith.constant dense<0.000000e+00> : vector<196x6xf32>
    %26 = tpu.matmul %25, %0, %cst_21 {dimension_numbers = #tpu.dot_dimension_numbers<[1], [0], [0], [1], [0, 0, 1, 1], [], []>} : vector<196x75xf32>, vector<75x6xf32>, vector<196x6xf32> -> vector<196x6xf32>
    %27 = vector.broadcast %1 : vector<1x6xf32> to vector<196x6xf32>
    %28 = arith.addf %26, %27 : vector<196x6xf32>
    %cst_22 = arith.constant 0.000000e+00 : f32
    %29 = vector.broadcast %cst_22 : f32 to vector<196x6xf32>
    %30 = arith.maximumf %28, %29 : vector<196x6xf32>
    %31 = arith.maximumf %23, %30 : vector<196x6xf32>
    %32 = arith.maximumf %16, %31 : vector<196x6xf32>
    %c0_23 = arith.constant 0 : index
    %c0_24 = arith.constant 0 : index
    %c0_25 = arith.constant 0 : index
    %33 = vector.load %arg4[%c0_23, %c0_24, %c0_25] : memref<1x196x6xf32, #tpu.memory_space<vmem>>, vector<1x196x6xf32>
    %34 = vector.shape_cast %33 : vector<1x196x6xf32> to vector<196x6xf32>
    %35 = vector.shape_cast %32 : vector<196x6xf32> to vector<1x196x6xf32>
    tpu.vector_store %arg4[%c0_23, %c0_24, %c0_25], %35 {strides = array<i32>} : memref<1x196x6xf32, #tpu.memory_space<vmem>>, vector<1x196x6xf32>,
    return
  }
  func.func @transform_0(%arg0: i32) -> (i32, i32, i32, i32) {
    %c0_i32 = arith.constant 0 : i32
    %c0_i32_0 = arith.constant 0 : i32
    %c0_i32_1 = arith.constant 0 : i32
    %c0_i32_2 = arith.constant 0 : i32
    return %arg0, %c0_i32, %c0_i32_0, %c0_i32_1 : i32, i32, i32, i32
  }
  func.func @transform_1(%arg0: i32) -> (i32, i32) {
    %c0_i32 = arith.constant 0 : i32
    %c0_i32_0 = arith.constant 0 : i32
    %c0_i32_1 = arith.constant 0 : i32
    return %c0_i32, %c0_i32_0 : i32, i32
  }
  func.func @transform_2(%arg0: i32) -> (i32, i32) {
    %c0_i32 = arith.constant 0 : i32
    %c0_i32_0 = arith.constant 0 : i32
    %c0_i32_1 = arith.constant 0 : i32
    return %c0_i32, %c0_i32_0 : i32, i32
  }
  func.func @transform_3(%arg0: i32) -> (i32, i32, i32) {
    %c0_i32 = arith.constant 0 : i32
    %c0_i32_0 = arith.constant 0 : i32
    %c0_i32_1 = arith.constant 0 : i32
    return %arg0, %c0_i32, %c0_i32_0 : i32, i32, i32
  }
}

module attributes {stable_mosaic.version = 11 : i64} {
  func.func @_conv_relu_pool_kernel(%arg0: i32, %arg1: memref<1x4x25x150xf32, #tpu.memory_space<vmem>>, %arg2: memref<150x16xf32, #tpu.memory_space<vmem>>, %arg3: memref<1x16xf32, #tpu.memory_space<vmem>>, %arg4: memref<1x25x16xf32, #tpu.memory_space<vmem>>) attributes {dimension_semantics = [#tpu.dimension_semantics<parallel>], iteration_bounds = array<i64: 2>, scalar_prefetch = 0 : i64, scratch_operands = 0 : i64, tpu.core_type = #tpu.core_type<tc>, window_params = [{transform_indices = @transform_0, window_bounds = array<i64: 1, 4, 25, 150>}, {pipeline_mode = #tpu.pipeline_mode<synchronous>, transform_indices = @transform_1, window_bounds = array<i64: 150, 16>}, {pipeline_mode = #tpu.pipeline_mode<synchronous>, transform_indices = @transform_2, window_bounds = array<i64: 1, 16>}, {transform_indices = @transform_3, window_bounds = array<i64: 1, 25, 16>}]} {
    %c0 = arith.constant 0 : index
    %c0_0 = arith.constant 0 : index
    %0 = vector.load %arg2[%c0, %c0_0] : memref<150x16xf32, #tpu.memory_space<vmem>>, vector<150x16xf32>
    %c0_1 = arith.constant 0 : index
    %c0_2 = arith.constant 0 : index
    %1 = vector.load %arg3[%c0_1, %c0_2] : memref<1x16xf32, #tpu.memory_space<vmem>>, vector<1x16xf32>
    %c0_3 = arith.constant 0 : index
    %c0_4 = arith.constant 0 : index
    %c0_5 = arith.constant 0 : index
    %c0_6 = arith.constant 0 : index
    %2 = vector.load %arg1[%c0_3, %c0_4, %c0_5, %c0_6] : memref<1x4x25x150xf32, #tpu.memory_space<vmem>>, vector<1x1x25x150xf32>
    %3 = vector.shape_cast %2 : vector<1x1x25x150xf32> to vector<25x150xf32>
    %cst = arith.constant dense<0.000000e+00> : vector<25x16xf32>
    %4 = tpu.matmul %3, %0, %cst {dimension_numbers = #tpu.dot_dimension_numbers<[1], [0], [0], [1], [0, 0, 1, 1], [], []>} : vector<25x150xf32>, vector<150x16xf32>, vector<25x16xf32> -> vector<25x16xf32>
    %5 = vector.broadcast %1 : vector<1x16xf32> to vector<25x16xf32>
    %6 = arith.addf %4, %5 : vector<25x16xf32>
    %cst_7 = arith.constant 0.000000e+00 : f32
    %7 = vector.broadcast %cst_7 : f32 to vector<25x16xf32>
    %8 = arith.maximumf %6, %7 : vector<25x16xf32>
    %c0_8 = arith.constant 0 : index
    %c1 = arith.constant 1 : index
    %c0_9 = arith.constant 0 : index
    %c0_10 = arith.constant 0 : index
    %9 = vector.load %arg1[%c0_8, %c1, %c0_9, %c0_10] : memref<1x4x25x150xf32, #tpu.memory_space<vmem>>, vector<1x1x25x150xf32>
    %10 = vector.shape_cast %9 : vector<1x1x25x150xf32> to vector<25x150xf32>
    %cst_11 = arith.constant dense<0.000000e+00> : vector<25x16xf32>
    %11 = tpu.matmul %10, %0, %cst_11 {dimension_numbers = #tpu.dot_dimension_numbers<[1], [0], [0], [1], [0, 0, 1, 1], [], []>} : vector<25x150xf32>, vector<150x16xf32>, vector<25x16xf32> -> vector<25x16xf32>
    %12 = vector.broadcast %1 : vector<1x16xf32> to vector<25x16xf32>
    %13 = arith.addf %11, %12 : vector<25x16xf32>
    %cst_12 = arith.constant 0.000000e+00 : f32
    %14 = vector.broadcast %cst_12 : f32 to vector<25x16xf32>
    %15 = arith.maximumf %13, %14 : vector<25x16xf32>
    %16 = arith.maximumf %8, %15 : vector<25x16xf32>
    %c0_13 = arith.constant 0 : index
    %c2 = arith.constant 2 : index
    %c0_14 = arith.constant 0 : index
    %c0_15 = arith.constant 0 : index
    %17 = vector.load %arg1[%c0_13, %c2, %c0_14, %c0_15] : memref<1x4x25x150xf32, #tpu.memory_space<vmem>>, vector<1x1x25x150xf32>
    %18 = vector.shape_cast %17 : vector<1x1x25x150xf32> to vector<25x150xf32>
    %cst_16 = arith.constant dense<0.000000e+00> : vector<25x16xf32>
    %19 = tpu.matmul %18, %0, %cst_16 {dimension_numbers = #tpu.dot_dimension_numbers<[1], [0], [0], [1], [0, 0, 1, 1], [], []>} : vector<25x150xf32>, vector<150x16xf32>, vector<25x16xf32> -> vector<25x16xf32>
    %20 = vector.broadcast %1 : vector<1x16xf32> to vector<25x16xf32>
    %21 = arith.addf %19, %20 : vector<25x16xf32>
    %cst_17 = arith.constant 0.000000e+00 : f32
    %22 = vector.broadcast %cst_17 : f32 to vector<25x16xf32>
    %23 = arith.maximumf %21, %22 : vector<25x16xf32>
    %c0_18 = arith.constant 0 : index
    %c3 = arith.constant 3 : index
    %c0_19 = arith.constant 0 : index
    %c0_20 = arith.constant 0 : index
    %24 = vector.load %arg1[%c0_18, %c3, %c0_19, %c0_20] : memref<1x4x25x150xf32, #tpu.memory_space<vmem>>, vector<1x1x25x150xf32>
    %25 = vector.shape_cast %24 : vector<1x1x25x150xf32> to vector<25x150xf32>
    %cst_21 = arith.constant dense<0.000000e+00> : vector<25x16xf32>
    %26 = tpu.matmul %25, %0, %cst_21 {dimension_numbers = #tpu.dot_dimension_numbers<[1], [0], [0], [1], [0, 0, 1, 1], [], []>} : vector<25x150xf32>, vector<150x16xf32>, vector<25x16xf32> -> vector<25x16xf32>
    %27 = vector.broadcast %1 : vector<1x16xf32> to vector<25x16xf32>
    %28 = arith.addf %26, %27 : vector<25x16xf32>
    %cst_22 = arith.constant 0.000000e+00 : f32
    %29 = vector.broadcast %cst_22 : f32 to vector<25x16xf32>
    %30 = arith.maximumf %28, %29 : vector<25x16xf32>
    %31 = arith.maximumf %23, %30 : vector<25x16xf32>
    %32 = arith.maximumf %16, %31 : vector<25x16xf32>
    %c0_23 = arith.constant 0 : index
    %c0_24 = arith.constant 0 : index
    %c0_25 = arith.constant 0 : index
    %33 = vector.load %arg4[%c0_23, %c0_24, %c0_25] : memref<1x25x16xf32, #tpu.memory_space<vmem>>, vector<1x25x16xf32>
    %34 = vector.shape_cast %33 : vector<1x25x16xf32> to vector<25x16xf32>
    %35 = vector.shape_cast %32 : vector<25x16xf32> to vector<1x25x16xf32>
    tpu.vector_store %arg4[%c0_23, %c0_24, %c0_25], %35 {strides = array<i32>} : memref<1x25x16xf32, #tpu.memory_space<vmem>>, vector<1x25x16xf32>,
    return
  }
  func.func @transform_0(%arg0: i32) -> (i32, i32, i32, i32) {
    %c0_i32 = arith.constant 0 : i32
    %c0_i32_0 = arith.constant 0 : i32
    %c0_i32_1 = arith.constant 0 : i32
    %c0_i32_2 = arith.constant 0 : i32
    return %arg0, %c0_i32, %c0_i32_0, %c0_i32_1 : i32, i32, i32, i32
  }
  func.func @transform_1(%arg0: i32) -> (i32, i32) {
    %c0_i32 = arith.constant 0 : i32
    %c0_i32_0 = arith.constant 0 : i32
    %c0_i32_1 = arith.constant 0 : i32
    return %c0_i32, %c0_i32_0 : i32, i32
  }
  func.func @transform_2(%arg0: i32) -> (i32, i32) {
    %c0_i32 = arith.constant 0 : i32
    %c0_i32_0 = arith.constant 0 : i32
    %c0_i32_1 = arith.constant 0 : i32
    return %c0_i32, %c0_i32_0 : i32, i32
  }
  func.func @transform_3(%arg0: i32) -> (i32, i32, i32) {
    %c0_i32 = arith.constant 0 : i32
    %c0_i32_0 = arith.constant 0 : i32
    %c0_i32_1 = arith.constant 0 : i32
    return %arg0, %c0_i32, %c0_i32_0 : i32, i32, i32
  }
}

module attributes {stable_mosaic.version = 11 : i64} {
  func.func @_fc_kernel(%arg0: memref<2x400xf32, #tpu.memory_space<vmem>>, %arg1: memref<400x120xf32, #tpu.memory_space<vmem>>, %arg2: memref<1x120xf32, #tpu.memory_space<vmem>>, %arg3: memref<120x84xf32, #tpu.memory_space<vmem>>, %arg4: memref<1x84xf32, #tpu.memory_space<vmem>>, %arg5: memref<84x25xf32, #tpu.memory_space<vmem>>, %arg6: memref<1x25xf32, #tpu.memory_space<vmem>>, %arg7: memref<25x2xf32, #tpu.memory_space<vmem>>, %arg8: memref<1x2xf32, #tpu.memory_space<vmem>>, %arg9: memref<2x2xf32, #tpu.memory_space<vmem>>) attributes {dimension_semantics = [], scalar_prefetch = 0 : i64, scratch_operands = 0 : i64, tpu.core_type = #tpu.core_type<tc>} {
    %c0 = arith.constant 0 : index
    %c0_0 = arith.constant 0 : index
    %0 = vector.load %arg0[%c0, %c0_0] : memref<2x400xf32, #tpu.memory_space<vmem>>, vector<2x400xf32>
    %c0_1 = arith.constant 0 : index
    %c0_2 = arith.constant 0 : index
    %1 = vector.load %arg1[%c0_1, %c0_2] : memref<400x120xf32, #tpu.memory_space<vmem>>, vector<400x120xf32>
    %cst = arith.constant dense<0.000000e+00> : vector<2x120xf32>
    %2 = tpu.matmul %0, %1, %cst {dimension_numbers = #tpu.dot_dimension_numbers<[1], [0], [0], [1], [0, 0, 1, 1], [], []>} : vector<2x400xf32>, vector<400x120xf32>, vector<2x120xf32> -> vector<2x120xf32>
    %c0_3 = arith.constant 0 : index
    %c0_4 = arith.constant 0 : index
    %3 = vector.load %arg2[%c0_3, %c0_4] : memref<1x120xf32, #tpu.memory_space<vmem>>, vector<1x120xf32>
    %4 = vector.broadcast %3 : vector<1x120xf32> to vector<2x120xf32>
    %5 = arith.addf %2, %4 : vector<2x120xf32>
    %cst_5 = arith.constant 0.000000e+00 : f32
    %6 = vector.broadcast %cst_5 : f32 to vector<2x120xf32>
    %7 = arith.maximumf %5, %6 : vector<2x120xf32>
    %c0_6 = arith.constant 0 : index
    %c0_7 = arith.constant 0 : index
    %8 = vector.load %arg3[%c0_6, %c0_7] : memref<120x84xf32, #tpu.memory_space<vmem>>, vector<120x84xf32>
    %cst_8 = arith.constant dense<0.000000e+00> : vector<2x84xf32>
    %9 = tpu.matmul %7, %8, %cst_8 {dimension_numbers = #tpu.dot_dimension_numbers<[1], [0], [0], [1], [0, 0, 1, 1], [], []>} : vector<2x120xf32>, vector<120x84xf32>, vector<2x84xf32> -> vector<2x84xf32>
    %c0_9 = arith.constant 0 : index
    %c0_10 = arith.constant 0 : index
    %10 = vector.load %arg4[%c0_9, %c0_10] : memref<1x84xf32, #tpu.memory_space<vmem>>, vector<1x84xf32>
    %11 = vector.broadcast %10 : vector<1x84xf32> to vector<2x84xf32>
    %12 = arith.addf %9, %11 : vector<2x84xf32>
    %cst_11 = arith.constant 0.000000e+00 : f32
    %13 = vector.broadcast %cst_11 : f32 to vector<2x84xf32>
    %14 = arith.maximumf %12, %13 : vector<2x84xf32>
    %c0_12 = arith.constant 0 : index
    %c0_13 = arith.constant 0 : index
    %15 = vector.load %arg5[%c0_12, %c0_13] : memref<84x25xf32, #tpu.memory_space<vmem>>, vector<84x25xf32>
    %cst_14 = arith.constant dense<0.000000e+00> : vector<2x25xf32>
    %16 = tpu.matmul %14, %15, %cst_14 {dimension_numbers = #tpu.dot_dimension_numbers<[1], [0], [0], [1], [0, 0, 1, 1], [], []>} : vector<2x84xf32>, vector<84x25xf32>, vector<2x25xf32> -> vector<2x25xf32>
    %c0_15 = arith.constant 0 : index
    %c0_16 = arith.constant 0 : index
    %17 = vector.load %arg6[%c0_15, %c0_16] : memref<1x25xf32, #tpu.memory_space<vmem>>, vector<1x25xf32>
    %18 = vector.broadcast %17 : vector<1x25xf32> to vector<2x25xf32>
    %19 = arith.addf %16, %18 : vector<2x25xf32>
    %cst_17 = arith.constant 0.000000e+00 : f32
    %20 = vector.broadcast %cst_17 : f32 to vector<2x25xf32>
    %21 = arith.maximumf %19, %20 : vector<2x25xf32>
    %c0_18 = arith.constant 0 : index
    %c0_19 = arith.constant 0 : index
    %22 = vector.load %arg7[%c0_18, %c0_19] : memref<25x2xf32, #tpu.memory_space<vmem>>, vector<25x2xf32>
    %cst_20 = arith.constant dense<0.000000e+00> : vector<2x2xf32>
    %23 = tpu.matmul %21, %22, %cst_20 {dimension_numbers = #tpu.dot_dimension_numbers<[1], [0], [0], [1], [0, 0, 1, 1], [], []>} : vector<2x25xf32>, vector<25x2xf32>, vector<2x2xf32> -> vector<2x2xf32>
    %c0_21 = arith.constant 0 : index
    %c0_22 = arith.constant 0 : index
    %24 = vector.load %arg8[%c0_21, %c0_22] : memref<1x2xf32, #tpu.memory_space<vmem>>, vector<1x2xf32>
    %25 = vector.broadcast %24 : vector<1x2xf32> to vector<2x2xf32>
    %26 = arith.addf %23, %25 : vector<2x2xf32>
    %c0_23 = arith.constant 0 : index
    %c0_24 = arith.constant 0 : index
    %27 = vector.load %arg9[%c0_23, %c0_24] : memref<2x2xf32, #tpu.memory_space<vmem>>, vector<2x2xf32>
    tpu.vector_store %arg9[%c0_23, %c0_24], %26 {strides = array<i32>} : memref<2x2xf32, #tpu.memory_space<vmem>>, vector<2x2xf32>,
    return
  }
}

</mosaic_0001>

<llo_original>
// kernel: lenet_cifar_forward.3
$region0: #{lenet_cifar_forward.3}
  #allocation0 [shape = 'u32[]', space=smem, size = 0x4, offset = 0x4, fixed_abs, tag = 'smem constant byte address 0x4 - core index']
  #allocation1 [shape = 'u32[144,128]{1,0:T(1,128)}', space=vmem, size = 0x12000, scoped, tag = 'internal scratch']
  %s0 = inlined_call_operand.vmem [shape: f32[2,4,196,75], index: 0, kind: input, shape index: {}]
  %s1 = inlined_call_operand.vmem [shape: f32[75,6], index: 1, kind: input, shape index: {}]
  %s2 = inlined_call_operand.vmem [shape: f32[1,6], index: 2, kind: input, shape index: {}]
  %s3 = inlined_call_operand.vmem [shape: f32[2,196,6], index: 3, kind: output, shape index: {}]
  %s4 = sld [smem:[#allocation0]]
  $region45: #{lenet_cifar_forward.3} parent=0
    _
  %s6 = ssub.s32 1, %s4
  %s7 = scalar_select 0, %s6, %s4
  loop: start=0, step=1, limit=4
  $region2: #{lenet_cifar_forward.3} parent=0 // loop_pre_header
    _
  $region3: #{lenet_cifar_forward.3} parent=0 // loop_header
    %s9 = sphi 0, %s13
    %p10 = scmp.ge.s32.totalorder %s9, 4
    %s19 = sphi 0, %s21
    %s22 = sphi 0, %s19
    %s23 = sphi 0, %s22
    %s39 = sphi 0, %s23
    %s43 = sphi 0, %s43
    %s45 = sphi 0, %s43
    %s46 = sphi 0, %s45
    %s60 = sphi 0, %s46
    %s64 = sphi 0, %s64
    %s66 = sphi 0, %s64
    %s67 = sphi 0, %s66
    %s81 = sphi 0, %s67
    %s87 = sphi 0, %s89
    %s90 = sphi 0, %s87
    %s91 = sphi 0, %s90
    %s107 = sphi 0, %s91
  $region4: #{lenet_cifar_forward.3} parent=0 // loop_header_branch
    %12 = sbr.rel (%p10) target = $region8
  $region5: #{lenet_cifar_forward.3} parent=0 // loop_body
    %s14 = ssub.s32 %s9, 1
    %s15 = ssub.s32 %s9, 2
    %s16 = sadd.s32 %s9, 1
    %s17 = ssub.s32 %s9, %s16
    %p18 = scmp.eq.s32.totalorder %s17, 0
    %s20 = sadd.s32 %s19, 1
    %s21 = scalar_select %p18, %s19, %s20
    %p24 = pneg %p18
    %p25 = scmp.eq.s32.totalorder %s9, 1
    %p26 = por %p24, %p25
    %p27 = scmp.ne.s32.totalorder %s19, %s22
    %p28 = scmp.eq.s32.totalorder %s9, 0
    %p29 = por %p27, %p28
    %p30 = scmp.ne.s32.totalorder %s19, %s22
    %p31 = scmp.eq.s32.totalorder %s14, 1
    %p32 = por %p30, %p31
    %p33 = scmp.ne.s32.totalorder %s22, %s23
    %p34 = scmp.eq.s32.totalorder %s14, 0
    %p35 = por %p33, %p34
    %p36 = scmp.ne.s32.totalorder %s22, %s23
    %p37 = scmp.eq.s32.totalorder %s15, 1
    %p38 = por %p36, %p37
    %p40 = scmp.ne.s32.totalorder %s23, %s39
    %p41 = scmp.eq.s32.totalorder %s15, 0
    %p42 = por %p40, %p41
    %s44 = sadd.s32 %s43, 1
    %p47 = scmp.eq.s32.totalorder %s9, 1
    %p48 = scmp.ne.s32.totalorder %s43, %s45
    %p49 = scmp.eq.s32.totalorder %s9, 0
    %p50 = por %p48, %p49
    %p51 = scmp.ne.s32.totalorder %s43, %s45
    %p52 = scmp.eq.s32.totalorder %s14, 1
    %p53 = por %p51, %p52
    %p54 = scmp.ne.s32.totalorder %s45, %s46
    %p55 = scmp.eq.s32.totalorder %s14, 0
    %p56 = por %p54, %p55
    %p57 = scmp.ne.s32.totalorder %s45, %s46
    %p58 = scmp.eq.s32.totalorder %s15, 1
    %p59 = por %p57, %p58
    %p61 = scmp.ne.s32.totalorder %s46, %s60
    %p62 = scmp.eq.s32.totalorder %s15, 0
    %p63 = por %p61, %p62
    %s65 = sadd.s32 %s64, 1
    %p68 = scmp.eq.s32.totalorder %s9, 1
    %p69 = scmp.ne.s32.totalorder %s64, %s66
    %p70 = scmp.eq.s32.totalorder %s9, 0
    %p71 = por %p69, %p70
    %p72 = scmp.ne.s32.totalorder %s64, %s66
    %p73 = scmp.eq.s32.totalorder %s14, 1
    %p74 = por %p72, %p73
    %p75 = scmp.ne.s32.totalorder %s66, %s67
    %p76 = scmp.eq.s32.totalorder %s14, 0
    %p77 = por %p75, %p76
    %p78 = scmp.ne.s32.totalorder %s66, %s67
    %p79 = scmp.eq.s32.totalorder %s15, 1
    %p80 = por %p78, %p79
    %p82 = scmp.ne.s32.totalorder %s67, %s81
    %p83 = scmp.eq.s32.totalorder %s15, 0
    %p84 = por %p82, %p83
    %s85 = ssub.s32 %s9, %s16
    %p86 = scmp.eq.s32.totalorder %s85, 0
    %s88 = sadd.s32 %s87, 1
    %s89 = scalar_select %p86, %s87, %s88
    %p92 = pneg %p86
    %p93 = scmp.eq.s32.totalorder %s9, 1
    %p94 = por %p92, %p93
    %p95 = scmp.ne.s32.totalorder %s87, %s90
    %p96 = scmp.eq.s32.totalorder %s9, 0
    %p97 = por %p95, %p96
    %p98 = scmp.ne.s32.totalorder %s87, %s90
    %p99 = scmp.eq.s32.totalorder %s14, 1
    %p100 = por %p98, %p99
    %p101 = scmp.ne.s32.totalorder %s90, %s91
    %p102 = scmp.eq.s32.totalorder %s14, 0
    %p103 = por %p101, %p102
    %p104 = scmp.ne.s32.totalorder %s90, %s91
    %p105 = scmp.eq.s32.totalorder %s15, 1
    %p106 = por %p104, %p105
    %p108 = scmp.ne.s32.totalorder %s91, %s107
    %p109 = scmp.eq.s32.totalorder %s15, 0
    %p110 = por %p108, %p109
    %p111 = scmp.le.s32.totalorder 1, %s9
    %p112 = scmp.lt.s32.totalorder %s9, 3
    %p113 = pnand %p111, %p112
    %p114 = pneg %p113
    // Predicated region
    $region9: #{lenet_cifar_forward.3} parent=5 // pred_check
      _
    $region10: #{lenet_cifar_forward.3} parent=5 // pred_check_branch
      %116 = sbr.rel (%p113) target = $region12
    $region11: #{lenet_cifar_forward.3} parent=5 // pred_region
      %s117 = ssub.s32 %s9, 1
      // Predicated region
      $region13: #{lenet_cifar_forward.3} parent=11 // pred_check
        %p118 = pneg %p56
      $region14: #{lenet_cifar_forward.3} parent=11 // pred_check_branch
        %120 = sbr.rel (%p118) target = $region16
      $region15: #{lenet_cifar_forward.3} parent=11 // pred_region
        _
      $region16: #{lenet_cifar_forward.3} parent=11 // pred_fallthru
        _
      // Predicated region
      $region17: #{lenet_cifar_forward.3} parent=11 // pred_check
        %p121 = pneg %p77
      $region18: #{lenet_cifar_forward.3} parent=11 // pred_check_branch
        %123 = sbr.rel (%p121) target = $region20
      $region19: #{lenet_cifar_forward.3} parent=11 // pred_region
        _
      $region20: #{lenet_cifar_forward.3} parent=11 // pred_fallthru
        _
    $region12: #{lenet_cifar_forward.3} parent=5 // pred_fallthru
      _
    %p124 = scmp.lt.s32.totalorder %s9, 2
    // Predicated region
    $region21: #{lenet_cifar_forward.3} parent=5 // pred_check
      %p125 = pneg %p124
    $region22: #{lenet_cifar_forward.3} parent=5 // pred_check_branch
      %127 = sbr.rel (%p125) target = $region24
    $region23: #{lenet_cifar_forward.3} parent=5 // pred_region
      // Predicated region
      $region25: #{lenet_cifar_forward.3} parent=23 // pred_check
        %p128 = pneg %p29
      $region26: #{lenet_cifar_forward.3} parent=23 // pred_check_branch
        %130 = sbr.rel (%p128) target = $region28
      $region27: #{lenet_cifar_forward.3} parent=23 // pred_region
        %p131 = scmp.lt.s32.totalorder %s9, 1
        %s132 = scalar_select %p131, %s9, 1
        %s133 = smul.addr %s132, 100
        %s134 = smul.addr %s133, 8
        %s135 = scalar_lea.vmem %s0, %s134
      $region28: #{lenet_cifar_forward.3} parent=23 // pred_fallthru
        _
    $region24: #{lenet_cifar_forward.3} parent=5 // pred_fallthru
      _
    %p136 = scmp.le.s32.totalorder 1, %s9
    %p137 = scmp.lt.s32.totalorder %s9, 3
    %p138 = pnand %p136, %p137
    %p139 = pneg %p138
    // Predicated region
    $region29: #{lenet_cifar_forward.3} parent=5 // pred_check
      _
    $region30: #{lenet_cifar_forward.3} parent=5 // pred_check_branch
      %141 = sbr.rel (%p138) target = $region32
    $region31: #{lenet_cifar_forward.3} parent=5 // pred_region
      %s142 = ssub.s32 %s9, 1
      %p143 = scmp.lt.s32.totalorder %s14, 1
      %s144 = scalar_select %p143, %s14, 1
      %s145 = smul.addr %s144, 100
      %s146 = smul.addr %s145, 8
      %s147 = scalar_lea.vmem %s0, %s146
      %p148 = pneg %p35
      %p149 = pneg %p32
      %p150 = pneg %p56
      %p151 = pneg %p53
      %p152 = pneg %p77
      %p153 = pneg %p74
      %p154 = pneg %p103
      %p155 = pneg %p100
      %p156 = scmp.lt.s32.totalorder %s14, 1
      %s157 = scalar_select %p156, %s14, 1
      %s158 = smul.addr %s157, 25
      %s159 = smul.addr %s158, 8
      %s160 = scalar_lea.vmem %s3, %s159
      %p161 = scmp.lt.s32.totalorder %s14, 1
      %s162 = scalar_select %p161, %s14, 1
      %s163 = smul.addr %s162, 100
      %s164 = smul.addr %s163, 8
      %s165 = scalar_lea.vmem %s0, %s164
      %p166 = scmp.lt.s32.totalorder %s14, 1
      %s167 = scalar_select %p166, %s14, 1
      %s168 = smul.addr %s167, 25
      %s169 = smul.addr %s168, 8
      %s170 = scalar_lea.vmem %s3, %s169
      %v171 = vld [vmem:[%s1] sm:$0xff]
      %v172 = vld [vmem:[%s1 + $0x8] sm:$0xff]
      %v173 = vld [vmem:[%s1 + $0x10] sm:$0xff]
      %v174 = vld [vmem:[%s1 + $0x18] sm:$0xff]
      %v175 = vld [vmem:[%s1 + $0x20] sm:$0xff]
      %v176 = vld [vmem:[%s1 + $0x28] sm:$0xff]
      %v177 = vld [vmem:[%s1 + $0x30] sm:$0xff]
      %v178 = vld [vmem:[%s1 + $0x38] sm:$0xff]
      %v179 = vld [vmem:[%s1 + $0x40] sm:$0xff]
      %v180 = vld [vmem:[%s1 + $0x48] sm:$0x7]
      %v181 = vld [vmem:[%s2] sm:$0x1]
      %v182 = vld [vmem:[%s165] sm:$0xff]
      %v183 = vld [vmem:[%s165 + $0x8] sm:$0xff]
      %v184 = vld [vmem:[%s165 + $0x10] sm:$0xff]
      %v185 = vld [vmem:[%s165 + $0x18] sm:$0xff]
      %v186 = vld [vmem:[%s165 + $0x20] sm:$0xff]
      %v187 = vld [vmem:[%s165 + $0x28] sm:$0xff]
      %v188 = vld [vmem:[%s165 + $0x30] sm:$0xff]
      %v189 = vld [vmem:[%s165 + $0x38] sm:$0xff]
      %v190 = vld [vmem:[%s165 + $0x40] sm:$0xff]
      %v191 = vld [vmem:[%s165 + $0x48] sm:$0xff]
      %v192 = vld [vmem:[%s165 + $0x50] sm:$0xff]
      %v193 = vld [vmem:[%s165 + $0x58] sm:$0xff]
      %v194 = vld [vmem:[%s165 + $0x60] sm:$0xff]
      %v195 = vld [vmem:[%s165 + $0x68] sm:$0xff]
      %v196 = vld [vmem:[%s165 + $0x70] sm:$0xff]
      %v197 = vld [vmem:[%s165 + $0x78] sm:$0xff]
      %v198 = vld [vmem:[%s165 + $0x80] sm:$0xff]
      %v199 = vld [vmem:[%s165 + $0x88] sm:$0xff]
      %v200 = vld [vmem:[%s165 + $0x90] sm:$0xff]
      %v201 = vld [vmem:[%s165 + $0x98] sm:$0xff]
      %v202 = vld [vmem:[%s165 + $0xa0] sm:$0xff]
      %v203 = vld [vmem:[%s165 + $0xa8] sm:$0xff]
      %v204 = vld [vmem:[%s165 + $0xb0] sm:$0xff]
      %v205 = vld [vmem:[%s165 + $0xb8] sm:$0xff]
      %v206 = vld [vmem:[%s165 + $0xc0] sm:$0xf]
      %v208 = vlaneseq
      %v209 = vshrl.u32 %v208, 7
      %v210 = vsub.s32 0, %v209
      %v211 = vrot.slane %v181, %v210
      %vm213 = vcmask 613376
      %v215 = vsel %vm213, %v182, 0
      %v218 = vsel %vm213, %v183, 0
      %v221 = vsel %vm213, %v184, 0
      %v224 = vsel %vm213, %v185, 0
      %v227 = vsel %vm213, %v186, 0
      %v230 = vsel %vm213, %v187, 0
      %v233 = vsel %vm213, %v188, 0
      %v236 = vsel %vm213, %v189, 0
      %v239 = vsel %vm213, %v190, 0
      %v242 = vsel %vm213, %v191, 0
      %v245 = vsel %vm213, %v192, 0
      %v248 = vsel %vm213, %v193, 0
      %v251 = vsel %vm213, %v194, 0
      %v254 = vsel %vm213, %v195, 0
      %v257 = vsel %vm213, %v196, 0
      %v260 = vsel %vm213, %v197, 0
      %v263 = vsel %vm213, %v198, 0
      %v266 = vsel %vm213, %v199, 0
      %v269 = vsel %vm213, %v200, 0
      %v272 = vsel %vm213, %v201, 0
      %v275 = vsel %vm213, %v202, 0
      %v278 = vsel %vm213, %v203, 0
      %v281 = vsel %vm213, %v204, 0
      %v284 = vsel %vm213, %v205, 0
      %v287 = vsel %vm213, %v206, 0
      %vm289 = vcmask 1042432
      %v291 = vsel %vm289, %v180, 0
      %293 = vmatprep.subr.mxu0 0.0
      %294 = vmatpush1.msra.mxu0 %v171
      %295 = vmatprep.subr.mxu0 0.0
      %296 = vmatpush1.msra.mxu0 %v172
      %297 = vmatprep.subr.mxu0 0.0
      %298 = vmatpush1.msra.mxu0 %v173
      %299 = vmatprep.subr.mxu0 0.0
      %300 = vmatpush1.msra.mxu0 %v174
      %301 = vmatprep.subr.mxu0 0.0
      %302 = vmatpush1.msra.mxu0 %v175
      %303 = vmatprep.subr.mxu0 0.0
      %304 = vmatpush1.msra.mxu0 %v176
      %305 = vmatprep.subr.mxu0 0.0
      %306 = vmatpush1.msra.mxu0 %v177
      %307 = vmatprep.subr.mxu0 0.0
      %308 = vmatpush1.msra.mxu0 %v178
      %309 = vmatprep.subr.mxu0 0.0
      %310 = vmatpush1.msra.mxu0 %v179
      %311 = vmatprep.subr.mxu0 0.0
      %312 = vmatpush1.msra.mxu0 %v291
      %313 = vmatprep.subr.mxu0 0.0
      %314 = vmatpush1.msra.mxu0 0.0
      %315 = vmatprep.subr.mxu0 0.0
      %316 = vmatpush1.msra.mxu0 0.0
      %317 = vmatprep.subr.mxu0 0.0
      %318 = vmatpush1.msra.mxu0 0.0
      %319 = vmatprep.subr.mxu0 0.0
      %320 = vmatpush1.msra.mxu0 0.0
      %321 = vmatprep.subr.mxu0 0.0
      %322 = vmatpush1.msra.mxu0 0.0
      %323 = vmatprep.subr.mxu0 0.0
      %324 = vmatpush1.msra.mxu0 0.0
      %325 = vmatprep.subr.mxu0 0.0
      %326 = vmatpush1.msra.mxu0 0.0
      %327 = vmatprep.subr.mxu0 0.0
      %328 = vmatpush1.msra.mxu0 0.0
      %329 = vmatprep.subr.mxu0 0.0
      %330 = vmatpush1.msra.mxu0 0.0
      %331 = vmatprep.subr.mxu0 0.0
      %332 = vmatpush1.msra.mxu0 0.0
      %333 = vmatprep.subr.mxu0 0.0
      %334 = vmatpush1.msra.mxu0 0.0
      %335 = vmatprep.subr.mxu0 0.0
      %336 = vmatpush1.msra.mxu0 0.0
      %337 = vmatprep.subr.mxu0 0.0
      %338 = vmatpush1.msra.mxu0 0.0
      %339 = vmatprep.subr.mxu0 0.0
      %340 = vmatpush1.msra.mxu0 0.0
      %341 = vmatprep.subr.mxu0 0.0
      %342 = vmatpush1.msra.mxu0 0.0
      %343 = vmatprep.subr.mxu0 0.0
      %344 = vmatpush1.msra.mxu0 0.0
      %345 = vmatprep.subr.mxu0 0.0
      %346 = vmatpush1.msra.mxu0 0.0
      %347 = vmatprep.subr.mxu0 0.0
      %348 = vmatpush1.msra.mxu0 0.0
      %349 = vmatprep.subr.mxu0 0.0
      %350 = vmatpush1.msra.mxu0 0.0
      %351 = vmatprep.subr.mxu0 0.0
      %352 = vmatpush1.msra.mxu0 0.0
      %353 = vmatprep.subr.mxu0 0.0
      %354 = vmatpush1.msra.mxu0 0.0
      %355 = vmatprep.subr.mxu0 0.0
      %356 = vmatpush1.msra.mxu0 0.0
      %357 = vmatprep.mubr.f32.mxu0 0.0
      %358 = vmatmul.mubr.f32.gmra.mrb[0].mxu0 %v215
      %v359 = vpop.f32.mrb[0].mxu0
      %v360 = vadd.f32 %v211, %v359
      %v361 = vpop.f32.mrb[0].mxu0
      %362 = vmatprep.mubr.f32.mxu0 0.0
      %363 = vmatmul.mubr.f32.gmra.mrb[0].mxu0 %v218
      %v364 = vpop.f32.mrb[0].mxu0
      %v365 = vadd.f32 %v211, %v364
      %v366 = vpop.f32.mrb[0].mxu0
      %367 = vmatprep.mubr.f32.mxu0 0.0
      %368 = vmatmul.mubr.f32.gmra.mrb[0].mxu0 %v221
      %v369 = vpop.f32.mrb[0].mxu0
      %v370 = vadd.f32 %v211, %v369
      %v371 = vpop.f32.mrb[0].mxu0
      %372 = vmatprep.mubr.f32.mxu0 0.0
      %373 = vmatmul.mubr.f32.gmra.mrb[0].mxu0 %v224
      %v374 = vpop.f32.mrb[0].mxu0
      %v375 = vadd.f32 %v211, %v374
      %v376 = vpop.f32.mrb[0].mxu0
      %377 = vmatprep.mubr.f32.mxu0 0.0
      %378 = vmatmul.mubr.f32.gmra.mrb[0].mxu0 %v227
      %v379 = vpop.f32.mrb[0].mxu0
      %v380 = vadd.f32 %v211, %v379
      %v381 = vpop.f32.mrb[0].mxu0
      %382 = vmatprep.mubr.f32.mxu0 0.0
      %383 = vmatmul.mubr.f32.gmra.mrb[0].mxu0 %v230
      %v384 = vpop.f32.mrb[0].mxu0
      %v385 = vadd.f32 %v211, %v384
      %v386 = vpop.f32.mrb[0].mxu0
      %387 = vmatprep.mubr.f32.mxu0 0.0
      %388 = vmatmul.mubr.f32.gmra.mrb[0].mxu0 %v233
      %v389 = vpop.f32.mrb[0].mxu0
      %v390 = vadd.f32 %v211, %v389
      %v391 = vpop.f32.mrb[0].mxu0
      %392 = vmatprep.mubr.f32.mxu0 0.0
      %393 = vmatmul.mubr.f32.gmra.mrb[0].mxu0 %v236
      %v394 = vpop.f32.mrb[0].mxu0
      %v395 = vadd.f32 %v211, %v394
      %v396 = vpop.f32.mrb[0].mxu0
      %397 = vmatprep.mubr.f32.mxu0 0.0
      %398 = vmatmul.mubr.f32.gmra.mrb[0].mxu0 %v239
      %v399 = vpop.f32.mrb[0].mxu0
      %v400 = vadd.f32 %v211, %v399
      %v401 = vpop.f32.mrb[0].mxu0
      %402 = vmatprep.mubr.f32.mxu0 0.0
      %403 = vmatmul.mubr.f32.gmra.mrb[0].mxu0 %v242
      %v404 = vpop.f32.mrb[0].mxu0
      %v405 = vadd.f32 %v211, %v404
      %v406 = vpop.f32.mrb[0].mxu0
      %407 = vmatprep.mubr.f32.mxu0 0.0
      %408 = vmatmul.mubr.f32.gmra.mrb[0].mxu0 %v245
      %v409 = vpop.f32.mrb[0].mxu0
      %v410 = vadd.f32 %v211, %v409
      %v411 = vpop.f32.mrb[0].mxu0
      %412 = vmatprep.mubr.f32.mxu0 0.0
      %413 = vmatmul.mubr.f32.gmra.mrb[0].mxu0 %v248
      %v414 = vpop.f32.mrb[0].mxu0
      %v415 = vadd.f32 %v211, %v414
      %v416 = vpop.f32.mrb[0].mxu0
      %417 = vmatprep.mubr.f32.mxu0 0.0
      %418 = vmatmul.mubr.f32.gmra.mrb[0].mxu0 %v251
      %v419 = vpop.f32.mrb[0].mxu0
      %v420 = vadd.f32 %v211, %v419
      %v421 = vpop.f32.mrb[0].mxu0
      %422 = vmatprep.mubr.f32.mxu0 0.0
      %423 = vmatmul.mubr.f32.gmra.mrb[0].mxu0 %v254
      %v424 = vpop.f32.mrb[0].mxu0
      %v425 = vadd.f32 %v211, %v424
      %v426 = vpop.f32.mrb[0].mxu0
      %427 = vmatprep.mubr.f32.mxu0 0.0
      %428 = vmatmul.mubr.f32.gmra.mrb[0].mxu0 %v257
      %v429 = vpop.f32.mrb[0].mxu0
      %v430 = vadd.f32 %v211, %v429
      %v431 = vpop.f32.mrb[0].mxu0
      %432 = vmatprep.mubr.f32.mxu0 0.0
      %433 = vmatmul.mubr.f32.gmra.mrb[0].mxu0 %v260
      %v434 = vpop.f32.mrb[0].mxu0
      %v435 = vadd.f32 %v211, %v434
      %v436 = vpop.f32.mrb[0].mxu0
      %437 = vmatprep.mubr.f32.mxu0 0.0
      %438 = vmatmul.mubr.f32.gmra.mrb[0].mxu0 %v263
      %v439 = vpop.f32.mrb[0].mxu0
      %v440 = vadd.f32 %v211, %v439
      %v441 = vpop.f32.mrb[0].mxu0
      %442 = vmatprep.mubr.f32.mxu0 0.0
      %443 = vmatmul.mubr.f32.gmra.mrb[0].mxu0 %v266
      %v444 = vpop.f32.mrb[0].mxu0
      %v445 = vadd.f32 %v211, %v444
      %v446 = vpop.f32.mrb[0].mxu0
      %447 = vmatprep.mubr.f32.mxu0 0.0
      %448 = vmatmul.mubr.f32.gmra.mrb[0].mxu0 %v269
      %v449 = vpop.f32.mrb[0].mxu0
      %v450 = vadd.f32 %v211, %v449
      %v451 = vpop.f32.mrb[0].mxu0
      %452 = vmatprep.mubr.f32.mxu0 0.0
      %453 = vmatmul.mubr.f32.gmra.mrb[0].mxu0 %v272
      %v454 = vpop.f32.mrb[0].mxu0
      %v455 = vadd.f32 %v211, %v454
      %v456 = vpop.f32.mrb[0].mxu0
      %457 = vmatprep.mubr.f32.mxu0 0.0
      %458 = vmatmul.mubr.f32.gmra.mrb[0].mxu0 %v275
      %v459 = vpop.f32.mrb[0].mxu0
      %v460 = vadd.f32 %v211, %v459
      %v461 = vpop.f32.mrb[0].mxu0
      %462 = vmatprep.mubr.f32.mxu0 0.0
      %463 = vmatmul.mubr.f32.gmra.mrb[0].mxu0 %v278
      %v464 = vpop.f32.mrb[0].mxu0
      %v465 = vadd.f32 %v211, %v464
      %v466 = vpop.f32.mrb[0].mxu0
      %467 = vmatprep.mubr.f32.mxu0 0.0
      %468 = vmatmul.mubr.f32.gmra.mrb[0].mxu0 %v281
      %v469 = vpop.f32.mrb[0].mxu0
      %v470 = vadd.f32 %v211, %v469
      %v471 = vpop.f32.mrb[0].mxu0
      %472 = vmatprep.mubr.f32.mxu0 0.0
      %473 = vmatmul.mubr.f32.gmra.mrb[0].mxu0 %v284
      %v474 = vpop.f32.mrb[0].mxu0
      %v475 = vadd.f32 %v211, %v474
      %v476 = vpop.f32.mrb[0].mxu0
      %477 = vmatprep.mubr.f32.mxu0 0.0
      %478 = vmatmul.mubr.f32.gmra.mrb[0].mxu0 %v287
      %v479 = vpop.f32.mrb[0].mxu0
      %v480 = vadd.f32 %v211, %v479
      %v481 = vpop.f32.mrb[0].mxu0
      %482 = vdwg.mxu0
      %v483 = vmax.f32 %v360, 0.0
      %v484 = vmax.f32 %v365, 0.0
      %v485 = vmax.f32 %v370, 0.0
      %v486 = vmax.f32 %v375, 0.0
      %v487 = vmax.f32 %v380, 0.0
      %v488 = vmax.f32 %v385, 0.0
      %v489 = vmax.f32 %v390, 0.0
      %v490 = vmax.f32 %v395, 0.0
      %v491 = vmax.f32 %v400, 0.0
      %v492 = vmax.f32 %v405, 0.0
      %v493 = vmax.f32 %v410, 0.0
      %v494 = vmax.f32 %v415, 0.0
      %v495 = vmax.f32 %v420, 0.0
      %v496 = vmax.f32 %v425, 0.0
      %v497 = vmax.f32 %v430, 0.0
      %v498 = vmax.f32 %v435, 0.0
      %v499 = vmax.f32 %v440, 0.0
      %v500 = vmax.f32 %v445, 0.0
      %v501 = vmax.f32 %v450, 0.0
      %v502 = vmax.f32 %v455, 0.0
      %v503 = vmax.f32 %v460, 0.0
      %v504 = vmax.f32 %v465, 0.0
      %v505 = vmax.f32 %v470, 0.0
      %v506 = vmax.f32 %v475, 0.0
      %v507 = vmax.f32 %v480, 0.0
      %s508 = scalar_lea.vmem %s165, 200
      %v509 = vld [vmem:[%s508] sm:$0xff]
      %v510 = vld [vmem:[%s508 + $0x8] sm:$0xff]
      %v511 = vld [vmem:[%s508 + $0x10] sm:$0xff]
      %v512 = vld [vmem:[%s508 + $0x18] sm:$0xff]
      %v513 = vld [vmem:[%s508 + $0x20] sm:$0xff]
      %v514 = vld [vmem:[%s508 + $0x28] sm:$0xff]
      %v515 = vld [vmem:[%s508 + $0x30] sm:$0xff]
      %v516 = vld [vmem:[%s508 + $0x38] sm:$0xff]
      %v517 = vld [vmem:[%s508 + $0x40] sm:$0xff]
      %v518 = vld [vmem:[%s508 + $0x48] sm:$0xff]
      %v519 = vld [vmem:[%s508 + $0x50] sm:$0xff]
      %v520 = vld [vmem:[%s508 + $0x58] sm:$0xff]
      %v521 = vld [vmem:[%s508 + $0x60] sm:$0xff]
      %v522 = vld [vmem:[%s508 + $0x68] sm:$0xff]
      %v523 = vld [vmem:[%s508 + $0x70] sm:$0xff]
      %v524 = vld [vmem:[%s508 + $0x78] sm:$0xff]
      %v525 = vld [vmem:[%s508 + $0x80] sm:$0xff]
      %v526 = vld [vmem:[%s508 + $0x88] sm:$0xff]
      %v527 = vld [vmem:[%s508 + $0x90] sm:$0xff]
      %v528 = vld [vmem:[%s508 + $0x98] sm:$0xff]
      %v529 = vld [vmem:[%s508 + $0xa0] sm:$0xff]
      %v530 = vld [vmem:[%s508 + $0xa8] sm:$0xff]
      %v531 = vld [vmem:[%s508 + $0xb0] sm:$0xff]
      %v532 = vld [vmem:[%s508 + $0xb8] sm:$0xff]
      %v533 = vld [vmem:[%s508 + $0xc0] sm:$0xf]
      %v535 = vsel %vm213, %v509, 0
      %v538 = vsel %vm213, %v510, 0
      %v541 = vsel %vm213, %v511, 0
      %v544 = vsel %vm213, %v512, 0
      %v547 = vsel %vm213, %v513, 0
      %v550 = vsel %vm213, %v514, 0
      %v553 = vsel %vm213, %v515, 0
      %v556 = vsel %vm213, %v516, 0
      %v559 = vsel %vm213, %v517, 0
      %v562 = vsel %vm213, %v518, 0
      %v565 = vsel %vm213, %v519, 0
      %v568 = vsel %vm213, %v520, 0
      %v571 = vsel %vm213, %v521, 0
      %v574 = vsel %vm213, %v522, 0
      %v577 = vsel %vm213, %v523, 0
      %v580 = vsel %vm213, %v524, 0
      %v583 = vsel %vm213, %v525, 0
      %v586 = vsel %vm213, %v526, 0
      %v589 = vsel %vm213, %v527, 0
      %v592 = vsel %vm213, %v528, 0
      %v595 = vsel %vm213, %v529, 0
      %v598 = vsel %vm213, %v530, 0
      %v601 = vsel %vm213, %v531, 0
      %v604 = vsel %vm213, %v532, 0
      %v607 = vsel %vm213, %v533, 0
      %609 = vmatprep.subr.mxu0 0.0
      %610 = vmatpush1.msra.mxu0 %v171
      %611 = vmatprep.subr.mxu0 0.0
      %612 = vmatpush1.msra.mxu0 %v172
      %613 = vmatprep.subr.mxu0 0.0
      %614 = vmatpush1.msra.mxu0 %v173
      %615 = vmatprep.subr.mxu0 0.0
      %616 = vmatpush1.msra.mxu0 %v174
      %617 = vmatprep.subr.mxu0 0.0
      %618 = vmatpush1.msra.mxu0 %v175
      %619 = vmatprep.subr.mxu0 0.0
      %620 = vmatpush1.msra.mxu0 %v176
      %621 = vmatprep.subr.mxu0 0.0
      %622 = vmatpush1.msra.mxu0 %v177
      %623 = vmatprep.subr.mxu0 0.0
      %624 = vmatpush1.msra.mxu0 %v178
      %625 = vmatprep.subr.mxu0 0.0
      %626 = vmatpush1.msra.mxu0 %v179
      %627 = vmatprep.subr.mxu0 0.0
      %628 = vmatpush1.msra.mxu0 %v291
      %629 = vmatprep.subr.mxu0 0.0
      %630 = vmatpush1.msra.mxu0 0.0
      %631 = vmatprep.subr.mxu0 0.0
      %632 = vmatpush1.msra.mxu0 0.0
      %633 = vmatprep.subr.mxu0 0.0
      %634 = vmatpush1.msra.mxu0 0.0
      %635 = vmatprep.subr.mxu0 0.0
      %636 = vmatpush1.msra.mxu0 0.0
      %637 = vmatprep.subr.mxu0 0.0
      %638 = vmatpush1.msra.mxu0 0.0
      %639 = vmatprep.subr.mxu0 0.0
      %640 = vmatpush1.msra.mxu0 0.0
      %641 = vmatprep.subr.mxu0 0.0
      %642 = vmatpush1.msra.mxu0 0.0
      %643 = vmatprep.subr.mxu0 0.0
      %644 = vmatpush1.msra.mxu0 0.0
      %645 = vmatprep.subr.mxu0 0.0
      %646 = vmatpush1.msra.mxu0 0.0
      %647 = vmatprep.subr.mxu0 0.0
      %648 = vmatpush1.msra.mxu0 0.0
      %649 = vmatprep.subr.mxu0 0.0
      %650 = vmatpush1.msra.mxu0 0.0
      %651 = vmatprep.subr.mxu0 0.0
      %652 = vmatpush1.msra.mxu0 0.0
      %653 = vmatprep.subr.mxu0 0.0
      %654 = vmatpush1.msra.mxu0 0.0
      %655 = vmatprep.subr.mxu0 0.0
      %656 = vmatpush1.msra.mxu0 0.0
      %657 = vmatprep.subr.mxu0 0.0
      %658 = vmatpush1.msra.mxu0 0.0
      %659 = vmatprep.subr.mxu0 0.0
      %660 = vmatpush1.msra.mxu0 0.0
      %661 = vmatprep.subr.mxu0 0.0
      %662 = vmatpush1.msra.mxu0 0.0
      %663 = vmatprep.subr.mxu0 0.0
      %664 = vmatpush1.msra.mxu0 0.0
      %665 = vmatprep.subr.mxu0 0.0
      %666 = vmatpush1.msra.mxu0 0.0
      %667 = vmatprep.subr.mxu0 0.0
      %668 = vmatpush1.msra.mxu0 0.0
      %669 = vmatprep.subr.mxu0 0.0
      %670 = vmatpush1.msra.mxu0 0.0
      %671 = vmatprep.subr.mxu0 0.0
      %672 = vmatpush1.msra.mxu0 0.0
      %673 = vmatprep.mubr.f32.mxu0 0.0
      %674 = vmatmul.mubr.f32.gmra.mrb[0].mxu0 %v535
      %v675 = vpop.f32.mrb[0].mxu0
      %v676 = vadd.f32 %v211, %v675
      %v677 = vpop.f32.mrb[0].mxu0
      %678 = vmatprep.mubr.f32.mxu0 0.0
      %679 = vmatmul.mubr.f32.gmra.mrb[0].mxu0 %v538
      %v680 = vpop.f32.mrb[0].mxu0
      %v681 = vadd.f32 %v211, %v680
      %v682 = vpop.f32.mrb[0].mxu0
      %683 = vmatprep.mubr.f32.mxu0 0.0
      %684 = vmatmul.mubr.f32.gmra.mrb[0].mxu0 %v541
      %v685 = vpop.f32.mrb[0].mxu0
      %v686 = vadd.f32 %v211, %v685
      %v687 = vpop.f32.mrb[0].mxu0
      %688 = vmatprep.mubr.f32.mxu0 0.0
      %689 = vmatmul.mubr.f32.gmra.mrb[0].mxu0 %v544
      %v690 = vpop.f32.mrb[0].mxu0
      %v691 = vadd.f32 %v211, %v690
      %v692 = vpop.f32.mrb[0].mxu0
      %693 = vmatprep.mubr.f32.mxu0 0.0
      %694 = vmatmul.mubr.f32.gmra.mrb[0].mxu0 %v547
      %v695 = vpop.f32.mrb[0].mxu0
      %v696 = vadd.f32 %v211, %v695
      %v697 = vpop.f32.mrb[0].mxu0
      %698 = vmatprep.mubr.f32.mxu0 0.0
      %699 = vmatmul.mubr.f32.gmra.mrb[0].mxu0 %v550
      %v700 = vpop.f32.mrb[0].mxu0
      %v701 = vadd.f32 %v211, %v700
      %v702 = vpop.f32.mrb[0].mxu0
      %703 = vmatprep.mubr.f32.mxu0 0.0
      %704 = vmatmul.mubr.f32.gmra.mrb[0].mxu0 %v553
      %v705 = vpop.f32.mrb[0].mxu0
      %v706 = vadd.f32 %v211, %v705
      %v707 = vpop.f32.mrb[0].mxu0
      %708 = vmatprep.mubr.f32.mxu0 0.0
      %709 = vmatmul.mubr.f32.gmra.mrb[0].mxu0 %v556
      %v710 = vpop.f32.mrb[0].mxu0
      %v711 = vadd.f32 %v211, %v710
      %v712 = vpop.f32.mrb[0].mxu0
      %713 = vmatprep.mubr.f32.mxu0 0.0
      %714 = vmatmul.mubr.f32.gmra.mrb[0].mxu0 %v559
      %v715 = vpop.f32.mrb[0].mxu0
      %v716 = vadd.f32 %v211, %v715
      %v717 = vpop.f32.mrb[0].mxu0
      %718 = vmatprep.mubr.f32.mxu0 0.0
      %719 = vmatmul.mubr.f32.gmra.mrb[0].mxu0 %v562
      %v720 = vpop.f32.mrb[0].mxu0
      %v721 = vadd.f32 %v211, %v720
      %v722 = vpop.f32.mrb[0].mxu0
      %723 = vmatprep.mubr.f32.mxu0 0.0
      %724 = vmatmul.mubr.f32.gmra.mrb[0].mxu0 %v565
      %v725 = vpop.f32.mrb[0].mxu0
      %v726 = vadd.f32 %v211, %v725
      %v727 = vpop.f32.mrb[0].mxu0
      %728 = vmatprep.mubr.f32.mxu0 0.0
      %729 = vmatmul.mubr.f32.gmra.mrb[0].mxu0 %v568
      %v730 = vpop.f32.mrb[0].mxu0
      %v731 = vadd.f32 %v211, %v730
      %v732 = vpop.f32.mrb[0].mxu0
      %733 = vmatprep.mubr.f32.mxu0 0.0
      %734 = vmatmul.mubr.f32.gmra.mrb[0].mxu0 %v571
      %v735 = vpop.f32.mrb[0].mxu0
      %v736 = vadd.f32 %v211, %v735
      %v737 = vpop.f32.mrb[0].mxu0
      %738 = vmatprep.mubr.f32.mxu0 0.0
      %739 = vmatmul.mubr.f32.gmra.mrb[0].mxu0 %v574
      %v740 = vpop.f32.mrb[0].mxu0
      %v741 = vadd.f32 %v211, %v740
      %v742 = vpop.f32.mrb[0].mxu0
      %743 = vmatprep.mubr.f32.mxu0 0.0
      %744 = vmatmul.mubr.f32.gmra.mrb[0].mxu0 %v577
      %v745 = vpop.f32.mrb[0].mxu0
      %v746 = vadd.f32 %v211, %v745
      %v747 = vpop.f32.mrb[0].mxu0
      %748 = vmatprep.mubr.f32.mxu0 0.0
      %749 = vmatmul.mubr.f32.gmra.mrb[0].mxu0 %v580
      %v750 = vpop.f32.mrb[0].mxu0
      %v751 = vadd.f32 %v211, %v750
      %v752 = vpop.f32.mrb[0].mxu0
      %753 = vmatprep.mubr.f32.mxu0 0.0
      %754 = vmatmul.mubr.f32.gmra.mrb[0].mxu0 %v583
      %v755 = vpop.f32.mrb[0].mxu0
      %v756 = vadd.f32 %v211, %v755
      %v757 = vpop.f32.mrb[0].mxu0
      %758 = vmatprep.mubr.f32.mxu0 0.0
      %759 = vmatmul.mubr.f32.gmra.mrb[0].mxu0 %v586
      %v760 = vpop.f32.mrb[0].mxu0
      %v761 = vadd.f32 %v211, %v760
      %v762 = vpop.f32.mrb[0].mxu0
      %763 = vmatprep.mubr.f32.mxu0 0.0
      %764 = vmatmul.mubr.f32.gmra.mrb[0].mxu0 %v589
      %v765 = vpop.f32.mrb[0].mxu0
      %v766 = vadd.f32 %v211, %v765
      %v767 = vpop.f32.mrb[0].mxu0
      %768 = vmatprep.mubr.f32.mxu0 0.0
      %769 = vmatmul.mubr.f32.gmra.mrb[0].mxu0 %v592
      %v770 = vpop.f32.mrb[0].mxu0
      %v771 = vadd.f32 %v211, %v770
      %v772 = vpop.f32.mrb[0].mxu0
      %773 = vmatprep.mubr.f32.mxu0 0.0
      %774 = vmatmul.mubr.f32.gmra.mrb[0].mxu0 %v595
      %v775 = vpop.f32.mrb[0].mxu0
      %v776 = vadd.f32 %v211, %v775
      %v777 = vpop.f32.mrb[0].mxu0
      %778 = vmatprep.mubr.f32.mxu0 0.0
      %779 = vmatmul.mubr.f32.gmra.mrb[0].mxu0 %v598
      %v780 = vpop.f32.mrb[0].mxu0
      %v781 = vadd.f32 %v211, %v780
      %v782 = vpop.f32.mrb[0].mxu0
      %783 = vmatprep.mubr.f32.mxu0 0.0
      %784 = vmatmul.mubr.f32.gmra.mrb[0].mxu0 %v601
      %v785 = vpop.f32.mrb[0].mxu0
      %v786 = vadd.f32 %v211, %v785
      %v787 = vpop.f32.mrb[0].mxu0
      %788 = vmatprep.mubr.f32.mxu0 0.0
      %789 = vmatmul.mubr.f32.gmra.mrb[0].mxu0 %v604
      %v790 = vpop.f32.mrb[0].mxu0
      %v791 = vadd.f32 %v211, %v790
      %v792 = vpop.f32.mrb[0].mxu0
      %793 = vmatprep.mubr.f32.mxu0 0.0
      %794 = vmatmul.mubr.f32.gmra.mrb[0].mxu0 %v607
      %v795 = vpop.f32.mrb[0].mxu0
      %v796 = vadd.f32 %v211, %v795
      %v797 = vpop.f32.mrb[0].mxu0
      %798 = vdwg.mxu0
      %v799 = vmax.f32 %v676, 0.0
      %v800 = vmax.f32 %v681, 0.0
      %v801 = vmax.f32 %v686, 0.0
      %v802 = vmax.f32 %v691, 0.0
      %v803 = vmax.f32 %v696, 0.0
      %v804 = vmax.f32 %v701, 0.0
      %v805 = vmax.f32 %v706, 0.0
      %v806 = vmax.f32 %v711, 0.0
      %v807 = vmax.f32 %v716, 0.0
      %v808 = vmax.f32 %v721, 0.0
      %v809 = vmax.f32 %v726, 0.0
      %v810 = vmax.f32 %v731, 0.0
      %v811 = vmax.f32 %v736, 0.0
      %v812 = vmax.f32 %v741, 0.0
      %v813 = vmax.f32 %v746, 0.0
      %v814 = vmax.f32 %v751, 0.0
      %v815 = vmax.f32 %v756, 0.0
      %v816 = vmax.f32 %v761, 0.0
      %v817 = vmax.f32 %v766, 0.0
      %v818 = vmax.f32 %v771, 0.0
      %v819 = vmax.f32 %v776, 0.0
      %v820 = vmax.f32 %v781, 0.0
      %v821 = vmax.f32 %v786, 0.0
      %v822 = vmax.f32 %v791, 0.0
      %v823 = vmax.f32 %v796, 0.0
      %v824 = vmax.f32 %v483, %v799
      %v825 = vmax.f32 %v484, %v800
      %v826 = vmax.f32 %v485, %v801
      %v827 = vmax.f32 %v486, %v802
      %v828 = vmax.f32 %v487, %v803
      %v829 = vmax.f32 %v488, %v804
      %v830 = vmax.f32 %v489, %v805
      %v831 = vmax.f32 %v490, %v806
      %v832 = vmax.f32 %v491, %v807
      %v833 = vmax.f32 %v492, %v808
      %v834 = vmax.f32 %v493, %v809
      %v835 = vmax.f32 %v494, %v810
      %v836 = vmax.f32 %v495, %v811
      %v837 = vmax.f32 %v496, %v812
      %v838 = vmax.f32 %v497, %v813
      %v839 = vmax.f32 %v498, %v814
      %v840 = vmax.f32 %v499, %v815
      %v841 = vmax.f32 %v500, %v816
      %v842 = vmax.f32 %v501, %v817
      %v843 = vmax.f32 %v502, %v818
      %v844 = vmax.f32 %v503, %v819
      %v845 = vmax.f32 %v504, %v820
      %v846 = vmax.f32 %v505, %v821
      %v847 = vmax.f32 %v506, %v822
      %v848 = vmax.f32 %v507, %v823
      %s849 = scalar_lea.vmem %s165, 400
      %v850 = vld [vmem:[%s849] sm:$0xff]
      %v851 = vld [vmem:[%s849 + $0x8] sm:$0xff]
      %v852 = vld [vmem:[%s849 + $0x10] sm:$0xff]
      %v853 = vld [vmem:[%s849 + $0x18] sm:$0xff]
      %v854 = vld [vmem:[%s849 + $0x20] sm:$0xff]
      %v855 = vld [vmem:[%s849 + $0x28] sm:$0xff]
      %v856 = vld [vmem:[%s849 + $0x30] sm:$0xff]
      %v857 = vld [vmem:[%s849 + $0x38] sm:$0xff]
      %v858 = vld [vmem:[%s849 + $0x40] sm:$0xff]
      %v859 = vld [vmem:[%s849 + $0x48] sm:$0xff]
      %v860 = vld [vmem:[%s849 + $0x50] sm:$0xff]
      %v861 = vld [vmem:[%s849 + $0x58] sm:$0xff]
      %v862 = vld [vmem:[%s849 + $0x60] sm:$0xff]
      %v863 = vld [vmem:[%s849 + $0x68] sm:$0xff]
      %v864 = vld [vmem:[%s849 + $0x70] sm:$0xff]
      %v865 = vld [vmem:[%s849 + $0x78] sm:$0xff]
      %v866 = vld [vmem:[%s849 + $0x80] sm:$0xff]
      %v867 = vld [vmem:[%s849 + $0x88] sm:$0xff]
      %v868 = vld [vmem:[%s849 + $0x90] sm:$0xff]
      %v869 = vld [vmem:[%s849 + $0x98] sm:$0xff]
      %v870 = vld [vmem:[%s849 + $0xa0] sm:$0xff]
      %v871 = vld [vmem:[%s849 + $0xa8] sm:$0xff]
      %v872 = vld [vmem:[%s849 + $0xb0] sm:$0xff]
      %v873 = vld [vmem:[%s849 + $0xb8] sm:$0xff]
      %v874 = vld [vmem:[%s849 + $0xc0] sm:$0xf]
      %v876 = vsel %vm213, %v850, 0
      %v879 = vsel %vm213, %v851, 0
      %v882 = vsel %vm213, %v852, 0
      %v885 = vsel %vm213, %v853, 0
      %v888 = vsel %vm213, %v854, 0
      %v891 = vsel %vm213, %v855, 0
      %v894 = vsel %vm213, %v856, 0
      %v897 = vsel %vm213, %v857, 0
      %v900 = vsel %vm213, %v858, 0
      %v903 = vsel %vm213, %v859, 0
      %v906 = vsel %vm213, %v860, 0
      %v909 = vsel %vm213, %v861, 0
      %v912 = vsel %vm213, %v862, 0
      %v915 = vsel %vm213, %v863, 0
      %v918 = vsel %vm213, %v864, 0
      %v921 = vsel %vm213, %v865, 0
      %v924 = vsel %vm213, %v866, 0
      %v927 = vsel %vm213, %v867, 0
      %v930 = vsel %vm213, %v868, 0
      %v933 = vsel %vm213, %v869, 0
      %v936 = vsel %vm213, %v870, 0
      %v939 = vsel %vm213, %v871, 0
      %v942 = vsel %vm213, %v872, 0
      %v945 = vsel %vm213, %v873, 0
      %v948 = vsel %vm213, %v874, 0
      %950 = vmatprep.subr.mxu0 0.0
      %951 = vmatpush1.msra.mxu0 %v171
      %952 = vmatprep.subr.mxu0 0.0
      %953 = vmatpush1.msra.mxu0 %v172
      %954 = vmatprep.subr.mxu0 0.0
      %955 = vmatpush1.msra.mxu0 %v173
      %956 = vmatprep.subr.mxu0 0.0
      %957 = vmatpush1.msra.mxu0 %v174
      %958 = vmatprep.subr.mxu0 0.0
      %959 = vmatpush1.msra.mxu0 %v175
      %960 = vmatprep.subr.mxu0 0.0
      %961 = vmatpush1.msra.mxu0 %v176
      %962 = vmatprep.subr.mxu0 0.0
      %963 = vmatpush1.msra.mxu0 %v177
      %964 = vmatprep.subr.mxu0 0.0
      %965 = vmatpush1.msra.mxu0 %v178
      %966 = vmatprep.subr.mxu0 0.0
      %967 = vmatpush1.msra.mxu0 %v179
      %968 = vmatprep.subr.mxu0 0.0
      %969 = vmatpush1.msra.mxu0 %v291
      %970 = vmatprep.subr.mxu0 0.0
      %971 = vmatpush1.msra.mxu0 0.0
      %972 = vmatprep.subr.mxu0 0.0
      %973 = vmatpush1.msra.mxu0 0.0
      %974 = vmatprep.subr.mxu0 0.0
      %975 = vmatpush1.msra.mxu0 0.0
      %976 = vmatprep.subr.mxu0 0.0
      %977 = vmatpush1.msra.mxu0 0.0
      %978 = vmatprep.subr.mxu0 0.0
      %979 = vmatpush1.msra.mxu0 0.0
      %980 = vmatprep.subr.mxu0 0.0
      %981 = vmatpush1.msra.mxu0 0.0
      %982 = vmatprep.subr.mxu0 0.0
      %983 = vmatpush1.msra.mxu0 0.0
      %984 = vmatprep.subr.mxu0 0.0
      %985 = vmatpush1.msra.mxu0 0.0
      %986 = vmatprep.subr.mxu0 0.0
      %987 = vmatpush1.msra.mxu0 0.0
      %988 = vmatprep.subr.mxu0 0.0
      %989 = vmatpush1.msra.mxu0 0.0
      %990 = vmatprep.subr.mxu0 0.0
      %991 = vmatpush1.msra.mxu0 0.0
      %992 = vmatprep.subr.mxu0 0.0
      %993 = vmatpush1.msra.mxu0 0.0
      %994 = vmatprep.subr.mxu0 0.0
      %995 = vmatpush1.msra.mxu0 0.0
      %996 = vmatprep.subr.mxu0 0.0
      %997 = vmatpush1.msra.mxu0 0.0
      %998 = vmatprep.subr.mxu0 0.0
      %999 = vmatpush1.msra.mxu0 0.0
      %1000 = vmatprep.subr.mxu0 0.0
      %1001 = vmatpush1.msra.mxu0 0.0
      %1002 = vmatprep.subr.mxu0 0.0
      %1003 = vmatpush1.msra.mxu0 0.0
      %1004 = vmatprep.subr.mxu0 0.0
      %1005 = vmatpush1.msra.mxu0 0.0
      %1006 = vmatprep.subr.mxu0 0.0
      %1007 = vmatpush1.msra.mxu0 0.0
      %1008 = vmatprep.subr.mxu0 0.0
      %1009 = vmatpush1.msra.mxu0 0.0
      %1010 = vmatprep.subr.mxu0 0.0
      %1011 = vmatpush1.msra.mxu0 0.0
      %1012 = vmatprep.subr.mxu0 0.0
      %1013 = vmatpush1.msra.mxu0 0.0
      %1014 = vmatprep.mubr.f32.mxu0 0.0
      %1015 = vmatmul.mubr.f32.gmra.mrb[0].mxu0 %v876
      %v1016 = vpop.f32.mrb[0].mxu0
      %v1017 = vadd.f32 %v211, %v1016
      %v1018 = vpop.f32.mrb[0].mxu0
      %1019 = vmatprep.mubr.f32.mxu0 0.0
      %1020 = vmatmul.mubr.f32.gmra.mrb[0].mxu0 %v879
      %v1021 = vpop.f32.mrb[0].mxu0
      %v1022 = vadd.f32 %v211, %v1021
      %v1023 = vpop.f32.mrb[0].mxu0
      %1024 = vmatprep.mubr.f32.mxu0 0.0
      %1025 = vmatmul.mubr.f32.gmra.mrb[0].mxu0 %v882
      %v1026 = vpop.f32.mrb[0].mxu0
      %v1027 = vadd.f32 %v211, %v1026
      %v1028 = vpop.f32.mrb[0].mxu0
      %1029 = vmatprep.mubr.f32.mxu0 0.0
      %1030 = vmatmul.mubr.f32.gmra.mrb[0].mxu0 %v885
      %v1031 = vpop.f32.mrb[0].mxu0
      %v1032 = vadd.f32 %v211, %v1031
      %v1033 = vpop.f32.mrb[0].mxu0
      %1034 = vmatprep.mubr.f32.mxu0 0.0
      %1035 = vmatmul.mubr.f32.gmra.mrb[0].mxu0 %v888
      %v1036 = vpop.f32.mrb[0].mxu0
      %v1037 = vadd.f32 %v211, %v1036
      %v1038 = vpop.f32.mrb[0].mxu0
      %1039 = vmatprep.mubr.f32.mxu0 0.0
      %1040 = vmatmul.mubr.f32.gmra.mrb[0].mxu0 %v891
      %v1041 = vpop.f32.mrb[0].mxu0
      %v1042 = vadd.f32 %v211, %v1041
      %v1043 = vpop.f32.mrb[0].mxu0
      %1044 = vmatprep.mubr.f32.mxu0 0.0
      %1045 = vmatmul.mubr.f32.gmra.mrb[0].mxu0 %v894
      %v1046 = vpop.f32.mrb[0].mxu0
      %v1047 = vadd.f32 %v211, %v1046
      %v1048 = vpop.f32.mrb[0].mxu0
      %1049 = vmatprep.mubr.f32.mxu0 0.0
      %1050 = vmatmul.mubr.f32.gmra.mrb[0].mxu0 %v897
      %v1051 = vpop.f32.mrb[0].mxu0
      %v1052 = vadd.f32 %v211, %v1051
      %v1053 = vpop.f32.mrb[0].mxu0
      %1054 = vmatprep.mubr.f32.mxu0 0.0
      %1055 = vmatmul.mubr.f32.gmra.mrb[0].mxu0 %v900
      %v1056 = vpop.f32.mrb[0].mxu0
      %v1057 = vadd.f32 %v211, %v1056
      %v1058 = vpop.f32.mrb[0].mxu0
      %1059 = vmatprep.mubr.f32.mxu0 0.0
      %1060 = vmatmul.mubr.f32.gmra.mrb[0].mxu0 %v903
      %v1061 = vpop.f32.mrb[0].mxu0
      %v1062 = vadd.f32 %v211, %v1061
      %v1063 = vpop.f32.mrb[0].mxu0
      %1064 = vmatprep.mubr.f32.mxu0 0.0
      %1065 = vmatmul.mubr.f32.gmra.mrb[0].mxu0 %v906
      %v1066 = vpop.f32.mrb[0].mxu0
      %v1067 = vadd.f32 %v211, %v1066
      %v1068 = vpop.f32.mrb[0].mxu0
      %1069 = vmatprep.mubr.f32.mxu0 0.0
      %1070 = vmatmul.mubr.f32.gmra.mrb[0].mxu0 %v909
      %v1071 = vpop.f32.mrb[0].mxu0
      %v1072 = vadd.f32 %v211, %v1071
      %v1073 = vpop.f32.mrb[0].mxu0
      %1074 = vmatprep.mubr.f32.mxu0 0.0
      %1075 = vmatmul.mubr.f32.gmra.mrb[0].mxu0 %v912
      %v1076 = vpop.f32.mrb[0].mxu0
      %v1077 = vadd.f32 %v211, %v1076
      %v1078 = vpop.f32.mrb[0].mxu0
      %1079 = vmatprep.mubr.f32.mxu0 0.0
      %1080 = vmatmul.mubr.f32.gmra.mrb[0].mxu0 %v915
      %v1081 = vpop.f32.mrb[0].mxu0
      %v1082 = vadd.f32 %v211, %v1081
      %v1083 = vpop.f32.mrb[0].mxu0
      %1084 = vmatprep.mubr.f32.mxu0 0.0
      %1085 = vmatmul.mubr.f32.gmra.mrb[0].mxu0 %v918
      %v1086 = vpop.f32.mrb[0].mxu0
      %v1087 = vadd.f32 %v211, %v1086
      %v1088 = vpop.f32.mrb[0].mxu0
      %1089 = vmatprep.mubr.f32.mxu0 0.0
      %1090 = vmatmul.mubr.f32.gmra.mrb[0].mxu0 %v921
      %v1091 = vpop.f32.mrb[0].mxu0
      %v1092 = vadd.f32 %v211, %v1091
      %v1093 = vpop.f32.mrb[0].mxu0
      %1094 = vmatprep.mubr.f32.mxu0 0.0
      %1095 = vmatmul.mubr.f32.gmra.mrb[0].mxu0 %v924
      %v1096 = vpop.f32.mrb[0].mxu0
      %v1097 = vadd.f32 %v211, %v1096
      %v1098 = vpop.f32.mrb[0].mxu0
      %1099 = vmatprep.mubr.f32.mxu0 0.0
      %1100 = vmatmul.mubr.f32.gmra.mrb[0].mxu0 %v927
      %v1101 = vpop.f32.mrb[0].mxu0
      %v1102 = vadd.f32 %v211, %v1101
      %v1103 = vpop.f32.mrb[0].mxu0
      %1104 = vmatprep.mubr.f32.mxu0 0.0
      %1105 = vmatmul.mubr.f32.gmra.mrb[0].mxu0 %v930
      %v1106 = vpop.f32.mrb[0].mxu0
      %v1107 = vadd.f32 %v211, %v1106
      %v1108 = vpop.f32.mrb[0].mxu0
      %1109 = vmatprep.mubr.f32.mxu0 0.0
      %1110 = vmatmul.mubr.f32.gmra.mrb[0].mxu0 %v933
      %v1111 = vpop.f32.mrb[0].mxu0
      %v1112 = vadd.f32 %v211, %v1111
      %v1113 = vpop.f32.mrb[0].mxu0
      %1114 = vmatprep.mubr.f32.mxu0 0.0
      %1115 = vmatmul.mubr.f32.gmra.mrb[0].mxu0 %v936
      %v1116 = vpop.f32.mrb[0].mxu0
      %v1117 = vadd.f32 %v211, %v1116
      %v1118 = vpop.f32.mrb[0].mxu0
      %1119 = vmatprep.mubr.f32.mxu0 0.0
      %1120 = vmatmul.mubr.f32.gmra.mrb[0].mxu0 %v939
      %v1121 = vpop.f32.mrb[0].mxu0
      %v1122 = vadd.f32 %v211, %v1121
      %v1123 = vpop.f32.mrb[0].mxu0
      %1124 = vmatprep.mubr.f32.mxu0 0.0
      %1125 = vmatmul.mubr.f32.gmra.mrb[0].mxu0 %v942
      %v1126 = vpop.f32.mrb[0].mxu0
      %v1127 = vadd.f32 %v211, %v1126
      %v1128 = vpop.f32.mrb[0].mxu0
      %1129 = vmatprep.mubr.f32.mxu0 0.0
      %1130 = vmatmul.mubr.f32.gmra.mrb[0].mxu0 %v945
      %v1131 = vpop.f32.mrb[0].mxu0
      %v1132 = vadd.f32 %v211, %v1131
      %v1133 = vpop.f32.mrb[0].mxu0
      %1134 = vmatprep.mubr.f32.mxu0 0.0
      %1135 = vmatmul.mubr.f32.gmra.mrb[0].mxu0 %v948
      %v1136 = vpop.f32.mrb[0].mxu0
      %v1137 = vadd.f32 %v211, %v1136
      %v1138 = vpop.f32.mrb[0].mxu0
      %1139 = vdwg.mxu0
      %v1140 = vmax.f32 %v1017, 0.0
      %v1141 = vmax.f32 %v1022, 0.0
      %v1142 = vmax.f32 %v1027, 0.0
      %v1143 = vmax.f32 %v1032, 0.0
      %v1144 = vmax.f32 %v1037, 0.0
      %v1145 = vmax.f32 %v1042, 0.0
      %v1146 = vmax.f32 %v1047, 0.0
      %v1147 = vmax.f32 %v1052, 0.0
      %v1148 = vmax.f32 %v1057, 0.0
      %v1149 = vmax.f32 %v1062, 0.0
      %v1150 = vmax.f32 %v1067, 0.0
      %v1151 = vmax.f32 %v1072, 0.0
      %v1152 = vmax.f32 %v1077, 0.0
      %v1153 = vmax.f32 %v1082, 0.0
      %v1154 = vmax.f32 %v1087, 0.0
      %v1155 = vmax.f32 %v1092, 0.0
      %v1156 = vmax.f32 %v1097, 0.0
      %v1157 = vmax.f32 %v1102, 0.0
      %v1158 = vmax.f32 %v1107, 0.0
      %v1159 = vmax.f32 %v1112, 0.0
      %v1160 = vmax.f32 %v1117, 0.0
      %v1161 = vmax.f32 %v1122, 0.0
      %v1162 = vmax.f32 %v1127, 0.0
      %v1163 = vmax.f32 %v1132, 0.0
      %v1164 = vmax.f32 %v1137, 0.0
      %s1165 = scalar_lea.vmem %s165, 600
      %v1166 = vld [vmem:[%s1165] sm:$0xff]
      %v1167 = vld [vmem:[%s1165 + $0x8] sm:$0xff]
      %v1168 = vld [vmem:[%s1165 + $0x10] sm:$0xff]
      %v1169 = vld [vmem:[%s1165 + $0x18] sm:$0xff]
      %v1170 = vld [vmem:[%s1165 + $0x20] sm:$0xff]
      %v1171 = vld [vmem:[%s1165 + $0x28] sm:$0xff]
      %v1172 = vld [vmem:[%s1165 + $0x30] sm:$0xff]
      %v1173 = vld [vmem:[%s1165 + $0x38] sm:$0xff]
      %v1174 = vld [vmem:[%s1165 + $0x40] sm:$0xff]
      %v1175 = vld [vmem:[%s1165 + $0x48] sm:$0xff]
      %v1176 = vld [vmem:[%s1165 + $0x50] sm:$0xff]
      %v1177 = vld [vmem:[%s1165 + $0x58] sm:$0xff]
      %v1178 = vld [vmem:[%s1165 + $0x60] sm:$0xff]
      %v1179 = vld [vmem:[%s1165 + $0x68] sm:$0xff]
      %v1180 = vld [vmem:[%s1165 + $0x70] sm:$0xff]
      %v1181 = vld [vmem:[%s1165 + $0x78] sm:$0xff]
      %v1182 = vld [vmem:[%s1165 + $0x80] sm:$0xff]
      %v1183 = vld [vmem:[%s1165 + $0x88] sm:$0xff]
      %v1184 = vld [vmem:[%s1165 + $0x90] sm:$0xff]
      %v1185 = vld [vmem:[%s1165 + $0x98] sm:$0xff]
      %v1186 = vld [vmem:[%s1165 + $0xa0] sm:$0xff]
      %v1187 = vld [vmem:[%s1165 + $0xa8] sm:$0xff]
      %v1188 = vld [vmem:[%s1165 + $0xb0] sm:$0xff]
      %v1189 = vld [vmem:[%s1165 + $0xb8] sm:$0xff]
      %v1190 = vld [vmem:[%s1165 + $0xc0] sm:$0xf]
      %v1192 = vsel %vm213, %v1166, 0
      %v1195 = vsel %vm213, %v1167, 0
      %v1198 = vsel %vm213, %v1168, 0
      %v1201 = vsel %vm213, %v1169, 0
      %v1204 = vsel %vm213, %v1170, 0
      %v1207 = vsel %vm213, %v1171, 0
      %v1210 = vsel %vm213, %v1172, 0
      %v1213 = vsel %vm213, %v1173, 0
      %v1216 = vsel %vm213, %v1174, 0
      %v1219 = vsel %vm213, %v1175, 0
      %v1222 = vsel %vm213, %v1176, 0
      %v1225 = vsel %vm213, %v1177, 0
      %v1228 = vsel %vm213, %v1178, 0
      %v1231 = vsel %vm213, %v1179, 0
      %v1234 = vsel %vm213, %v1180, 0
      %v1237 = vsel %vm213, %v1181, 0
      %v1240 = vsel %vm213, %v1182, 0
      %v1243 = vsel %vm213, %v1183, 0
      %v1246 = vsel %vm213, %v1184, 0
      %v1249 = vsel %vm213, %v1185, 0
      %v1252 = vsel %vm213, %v1186, 0
      %v1255 = vsel %vm213, %v1187, 0
      %v1258 = vsel %vm213, %v1188, 0
      %v1261 = vsel %vm213, %v1189, 0
      %v1264 = vsel %vm213, %v1190, 0
      %1266 = vmatprep.subr.mxu0 0.0
      %1267 = vmatpush1.msra.mxu0 %v171
      %1268 = vmatprep.subr.mxu0 0.0
      %1269 = vmatpush1.msra.mxu0 %v172
      %1270 = vmatprep.subr.mxu0 0.0
      %1271 = vmatpush1.msra.mxu0 %v173
      %1272 = vmatprep.subr.mxu0 0.0
      %1273 = vmatpush1.msra.mxu0 %v174
      %1274 = vmatprep.subr.mxu0 0.0
      %1275 = vmatpush1.msra.mxu0 %v175
      %1276 = vmatprep.subr.mxu0 0.0
      %1277 = vmatpush1.msra.mxu0 %v176
      %1278 = vmatprep.subr.mxu0 0.0
      %1279 = vmatpush1.msra.mxu0 %v177
      %1280 = vmatprep.subr.mxu0 0.0
      %1281 = vmatpush1.msra.mxu0 %v178
      %1282 = vmatprep.subr.mxu0 0.0
      %1283 = vmatpush1.msra.mxu0 %v179
      %1284 = vmatprep.subr.mxu0 0.0
      %1285 = vmatpush1.msra.mxu0 %v291
      %1286 = vmatprep.subr.mxu0 0.0
      %1287 = vmatpush1.msra.mxu0 0.0
      %1288 = vmatprep.subr.mxu0 0.0
      %1289 = vmatpush1.msra.mxu0 0.0
      %1290 = vmatprep.subr.mxu0 0.0
      %1291 = vmatpush1.msra.mxu0 0.0
      %1292 = vmatprep.subr.mxu0 0.0
      %1293 = vmatpush1.msra.mxu0 0.0
      %1294 = vmatprep.subr.mxu0 0.0
      %1295 = vmatpush1.msra.mxu0 0.0
      %1296 = vmatprep.subr.mxu0 0.0
      %1297 = vmatpush1.msra.mxu0 0.0
      %1298 = vmatprep.subr.mxu0 0.0
      %1299 = vmatpush1.msra.mxu0 0.0
      %1300 = vmatprep.subr.mxu0 0.0
      %1301 = vmatpush1.msra.mxu0 0.0
      %1302 = vmatprep.subr.mxu0 0.0
      %1303 = vmatpush1.msra.mxu0 0.0
      %1304 = vmatprep.subr.mxu0 0.0
      %1305 = vmatpush1.msra.mxu0 0.0
      %1306 = vmatprep.subr.mxu0 0.0
      %1307 = vmatpush1.msra.mxu0 0.0
      %1308 = vmatprep.subr.mxu0 0.0
      %1309 = vmatpush1.msra.mxu0 0.0
      %1310 = vmatprep.subr.mxu0 0.0
      %1311 = vmatpush1.msra.mxu0 0.0
      %1312 = vmatprep.subr.mxu0 0.0
      %1313 = vmatpush1.msra.mxu0 0.0
      %1314 = vmatprep.subr.mxu0 0.0
      %1315 = vmatpush1.msra.mxu0 0.0
      %1316 = vmatprep.subr.mxu0 0.0
      %1317 = vmatpush1.msra.mxu0 0.0
      %1318 = vmatprep.subr.mxu0 0.0
      %1319 = vmatpush1.msra.mxu0 0.0
      %1320 = vmatprep.subr.mxu0 0.0
      %1321 = vmatpush1.msra.mxu0 0.0
      %1322 = vmatprep.subr.mxu0 0.0
      %1323 = vmatpush1.msra.mxu0 0.0
      %1324 = vmatprep.subr.mxu0 0.0
      %1325 = vmatpush1.msra.mxu0 0.0
      %1326 = vmatprep.subr.mxu0 0.0
      %1327 = vmatpush1.msra.mxu0 0.0
      %1328 = vmatprep.subr.mxu0 0.0
      %1329 = vmatpush1.msra.mxu0 0.0
      %1330 = vmatprep.mubr.f32.mxu0 0.0
      %1331 = vmatmul.mubr.f32.gmra.mrb[0].mxu0 %v1192
      %v1332 = vpop.f32.mrb[0].mxu0
      %v1333 = vadd.f32 %v211, %v1332
      %v1334 = vpop.f32.mrb[0].mxu0
      %1335 = vmatprep.mubr.f32.mxu0 0.0
      %1336 = vmatmul.mubr.f32.gmra.mrb[0].mxu0 %v1195
      %v1337 = vpop.f32.mrb[0].mxu0
      %v1338 = vadd.f32 %v211, %v1337
      %v1339 = vpop.f32.mrb[0].mxu0
      %1340 = vmatprep.mubr.f32.mxu0 0.0
      %1341 = vmatmul.mubr.f32.gmra.mrb[0].mxu0 %v1198
      %v1342 = vpop.f32.mrb[0].mxu0
      %v1343 = vadd.f32 %v211, %v1342
      %v1344 = vpop.f32.mrb[0].mxu0
      %1345 = vmatprep.mubr.f32.mxu0 0.0
      %1346 = vmatmul.mubr.f32.gmra.mrb[0].mxu0 %v1201
      %v1347 = vpop.f32.mrb[0].mxu0
      %v1348 = vadd.f32 %v211, %v1347
      %v1349 = vpop.f32.mrb[0].mxu0
      %1350 = vmatprep.mubr.f32.mxu0 0.0
      %1351 = vmatmul.mubr.f32.gmra.mrb[0].mxu0 %v1204
      %v1352 = vpop.f32.mrb[0].mxu0
      %v1353 = vadd.f32 %v211, %v1352
      %v1354 = vpop.f32.mrb[0].mxu0
      %1355 = vmatprep.mubr.f32.mxu0 0.0
      %1356 = vmatmul.mubr.f32.gmra.mrb[0].mxu0 %v1207
      %v1357 = vpop.f32.mrb[0].mxu0
      %v1358 = vadd.f32 %v211, %v1357
      %v1359 = vpop.f32.mrb[0].mxu0
      %1360 = vmatprep.mubr.f32.mxu0 0.0
      %1361 = vmatmul.mubr.f32.gmra.mrb[0].mxu0 %v1210
      %v1362 = vpop.f32.mrb[0].mxu0
      %v1363 = vadd.f32 %v211, %v1362
      %v1364 = vpop.f32.mrb[0].mxu0
      %1365 = vmatprep.mubr.f32.mxu0 0.0
      %1366 = vmatmul.mubr.f32.gmra.mrb[0].mxu0 %v1213
      %v1367 = vpop.f32.mrb[0].mxu0
      %v1368 = vadd.f32 %v211, %v1367
      %v1369 = vpop.f32.mrb[0].mxu0
      %1370 = vmatprep.mubr.f32.mxu0 0.0
      %1371 = vmatmul.mubr.f32.gmra.mrb[0].mxu0 %v1216
      %v1372 = vpop.f32.mrb[0].mxu0
      %v1373 = vadd.f32 %v211, %v1372
      %v1374 = vpop.f32.mrb[0].mxu0
      %1375 = vmatprep.mubr.f32.mxu0 0.0
      %1376 = vmatmul.mubr.f32.gmra.mrb[0].mxu0 %v1219
      %v1377 = vpop.f32.mrb[0].mxu0
      %v1378 = vadd.f32 %v211, %v1377
      %v1379 = vpop.f32.mrb[0].mxu0
      %1380 = vmatprep.mubr.f32.mxu0 0.0
      %1381 = vmatmul.mubr.f32.gmra.mrb[0].mxu0 %v1222
      %v1382 = vpop.f32.mrb[0].mxu0
      %v1383 = vadd.f32 %v211, %v1382
      %v1384 = vpop.f32.mrb[0].mxu0
      %1385 = vmatprep.mubr.f32.mxu0 0.0
      %1386 = vmatmul.mubr.f32.gmra.mrb[0].mxu0 %v1225
      %v1387 = vpop.f32.mrb[0].mxu0
      %v1388 = vadd.f32 %v211, %v1387
      %v1389 = vpop.f32.mrb[0].mxu0
      %1390 = vmatprep.mubr.f32.mxu0 0.0
      %1391 = vmatmul.mubr.f32.gmra.mrb[0].mxu0 %v1228
      %v1392 = vpop.f32.mrb[0].mxu0
      %v1393 = vadd.f32 %v211, %v1392
      %v1394 = vpop.f32.mrb[0].mxu0
      %1395 = vmatprep.mubr.f32.mxu0 0.0
      %1396 = vmatmul.mubr.f32.gmra.mrb[0].mxu0 %v1231
      %v1397 = vpop.f32.mrb[0].mxu0
      %v1398 = vadd.f32 %v211, %v1397
      %v1399 = vpop.f32.mrb[0].mxu0
      %1400 = vmatprep.mubr.f32.mxu0 0.0
      %1401 = vmatmul.mubr.f32.gmra.mrb[0].mxu0 %v1234
      %v1402 = vpop.f32.mrb[0].mxu0
      %v1403 = vadd.f32 %v211, %v1402
      %v1404 = vpop.f32.mrb[0].mxu0
      %1405 = vmatprep.mubr.f32.mxu0 0.0
      %1406 = vmatmul.mubr.f32.gmra.mrb[0].mxu0 %v1237
      %v1407 = vpop.f32.mrb[0].mxu0
      %v1408 = vadd.f32 %v211, %v1407
      %v1409 = vpop.f32.mrb[0].mxu0
      %1410 = vmatprep.mubr.f32.mxu0 0.0
      %1411 = vmatmul.mubr.f32.gmra.mrb[0].mxu0 %v1240
      %v1412 = vpop.f32.mrb[0].mxu0
      %v1413 = vadd.f32 %v211, %v1412
      %v1414 = vpop.f32.mrb[0].mxu0
      %1415 = vmatprep.mubr.f32.mxu0 0.0
      %1416 = vmatmul.mubr.f32.gmra.mrb[0].mxu0 %v1243
      %v1417 = vpop.f32.mrb[0].mxu0
      %v1418 = vadd.f32 %v211, %v1417
      %v1419 = vpop.f32.mrb[0].mxu0
      %1420 = vmatprep.mubr.f32.mxu0 0.0
      %1421 = vmatmul.mubr.f32.gmra.mrb[0].mxu0 %v1246
      %v1422 = vpop.f32.mrb[0].mxu0
      %v1423 = vadd.f32 %v211, %v1422
      %v1424 = vpop.f32.mrb[0].mxu0
      %1425 = vmatprep.mubr.f32.mxu0 0.0
      %1426 = vmatmul.mubr.f32.gmra.mrb[0].mxu0 %v1249
      %v1427 = vpop.f32.mrb[0].mxu0
      %v1428 = vadd.f32 %v211, %v1427
      %v1429 = vpop.f32.mrb[0].mxu0
      %1430 = vmatprep.mubr.f32.mxu0 0.0
      %1431 = vmatmul.mubr.f32.gmra.mrb[0].mxu0 %v1252
      %v1432 = vpop.f32.mrb[0].mxu0
      %v1433 = vadd.f32 %v211, %v1432
      %v1434 = vpop.f32.mrb[0].mxu0
      %1435 = vmatprep.mubr.f32.mxu0 0.0
      %1436 = vmatmul.mubr.f32.gmra.mrb[0].mxu0 %v1255
      %v1437 = vpop.f32.mrb[0].mxu0
      %v1438 = vadd.f32 %v211, %v1437
      %v1439 = vpop.f32.mrb[0].mxu0
      %1440 = vmatprep.mubr.f32.mxu0 0.0
      %1441 = vmatmul.mubr.f32.gmra.mrb[0].mxu0 %v1258
      %v1442 = vpop.f32.mrb[0].mxu0
      %v1443 = vadd.f32 %v211, %v1442
      %v1444 = vpop.f32.mrb[0].mxu0
      %1445 = vmatprep.mubr.f32.mxu0 0.0
      %1446 = vmatmul.mubr.f32.gmra.mrb[0].mxu0 %v1261
      %v1447 = vpop.f32.mrb[0].mxu0
      %v1448 = vadd.f32 %v211, %v1447
      %v1449 = vpop.f32.mrb[0].mxu0
      %1450 = vmatprep.mubr.f32.mxu0 0.0
      %1451 = vmatmul.mubr.f32.gmra.mrb[0].mxu0 %v1264
      %v1452 = vpop.f32.mrb[0].mxu0
      %v1453 = vadd.f32 %v211, %v1452
      %v1454 = vpop.f32.mrb[0].mxu0
      %1455 = vdwg.mxu0
      %v1456 = vmax.f32 %v1333, 0.0
      %v1457 = vmax.f32 %v1338, 0.0
      %v1458 = vmax.f32 %v1343, 0.0
      %v1459 = vmax.f32 %v1348, 0.0
      %v1460 = vmax.f32 %v1353, 0.0
      %v1461 = vmax.f32 %v1358, 0.0
      %v1462 = vmax.f32 %v1363, 0.0
      %v1463 = vmax.f32 %v1368, 0.0
      %v1464 = vmax.f32 %v1373, 0.0
      %v1465 = vmax.f32 %v1378, 0.0
      %v1466 = vmax.f32 %v1383, 0.0
      %v1467 = vmax.f32 %v1388, 0.0
      %v1468 = vmax.f32 %v1393, 0.0
      %v1469 = vmax.f32 %v1398, 0.0
      %v1470 = vmax.f32 %v1403, 0.0
      %v1471 = vmax.f32 %v1408, 0.0
      %v1472 = vmax.f32 %v1413, 0.0
      %v1473 = vmax.f32 %v1418, 0.0
      %v1474 = vmax.f32 %v1423, 0.0
      %v1475 = vmax.f32 %v1428, 0.0
      %v1476 = vmax.f32 %v1433, 0.0
      %v1477 = vmax.f32 %v1438, 0.0
      %v1478 = vmax.f32 %v1443, 0.0
      %v1479 = vmax.f32 %v1448, 0.0
      %v1480 = vmax.f32 %v1453, 0.0
      %v1481 = vmax.f32 %v1140, %v1456
      %v1482 = vmax.f32 %v1141, %v1457
      %v1483 = vmax.f32 %v1142, %v1458
      %v1484 = vmax.f32 %v1143, %v1459
      %v1485 = vmax.f32 %v1144, %v1460
      %v1486 = vmax.f32 %v1145, %v1461
      %v1487 = vmax.f32 %v1146, %v1462
      %v1488 = vmax.f32 %v1147, %v1463
      %v1489 = vmax.f32 %v1148, %v1464
      %v1490 = vmax.f32 %v1149, %v1465
      %v1491 = vmax.f32 %v1150, %v1466
      %v1492 = vmax.f32 %v1151, %v1467
      %v1493 = vmax.f32 %v1152, %v1468
      %v1494 = vmax.f32 %v1153, %v1469
      %v1495 = vmax.f32 %v1154, %v1470
      %v1496 = vmax.f32 %v1155, %v1471
      %v1497 = vmax.f32 %v1156, %v1472
      %v1498 = vmax.f32 %v1157, %v1473
      %v1499 = vmax.f32 %v1158, %v1474
      %v1500 = vmax.f32 %v1159, %v1475
      %v1501 = vmax.f32 %v1160, %v1476
      %v1502 = vmax.f32 %v1161, %v1477
      %v1503 = vmax.f32 %v1162, %v1478
      %v1504 = vmax.f32 %v1163, %v1479
      %v1505 = vmax.f32 %v1164, %v1480
      %v1506 = vmax.f32 %v824, %v1481
      %v1507 = vmax.f32 %v825, %v1482
      %v1508 = vmax.f32 %v826, %v1483
      %v1509 = vmax.f32 %v827, %v1484
      %v1510 = vmax.f32 %v828, %v1485
      %v1511 = vmax.f32 %v829, %v1486
      %v1512 = vmax.f32 %v830, %v1487
      %v1513 = vmax.f32 %v831, %v1488
      %v1514 = vmax.f32 %v832, %v1489
      %v1515 = vmax.f32 %v833, %v1490
      %v1516 = vmax.f32 %v834, %v1491
      %v1517 = vmax.f32 %v835, %v1492
      %v1518 = vmax.f32 %v836, %v1493
      %v1519 = vmax.f32 %v837, %v1494
      %v1520 = vmax.f32 %v838, %v1495
      %v1521 = vmax.f32 %v839, %v1496
      %v1522 = vmax.f32 %v840, %v1497
      %v1523 = vmax.f32 %v841, %v1498
      %v1524 = vmax.f32 %v842, %v1499
      %v1525 = vmax.f32 %v843, %v1500
      %v1526 = vmax.f32 %v844, %v1501
      %v1527 = vmax.f32 %v845, %v1502
      %v1528 = vmax.f32 %v846, %v1503
      %v1529 = vmax.f32 %v847, %v1504
      %v1530 = vmax.f32 %v848, %v1505
      %vm1531 = vcmask 48128
      %1532 = vst.msk [vmem:[%s170] sm:$0xff] %vm1531, %v1506
      %1533 = vst.msk [vmem:[%s170 + $0x8] sm:$0xff] %vm1531, %v1507
      %1534 = vst.msk [vmem:[%s170 + $0x10] sm:$0xff] %vm1531, %v1508
      %1535 = vst.msk [vmem:[%s170 + $0x18] sm:$0xff] %vm1531, %v1509
      %1536 = vst.msk [vmem:[%s170 + $0x20] sm:$0xff] %vm1531, %v1510
      %1537 = vst.msk [vmem:[%s170 + $0x28] sm:$0xff] %vm1531, %v1511
      %1538 = vst.msk [vmem:[%s170 + $0x30] sm:$0xff] %vm1531, %v1512
      %1539 = vst.msk [vmem:[%s170 + $0x38] sm:$0xff] %vm1531, %v1513
      %1540 = vst.msk [vmem:[%s170 + $0x40] sm:$0xff] %vm1531, %v1514
      %1541 = vst.msk [vmem:[%s170 + $0x48] sm:$0xff] %vm1531, %v1515
      %1542 = vst.msk [vmem:[%s170 + $0x50] sm:$0xff] %vm1531, %v1516
      %1543 = vst.msk [vmem:[%s170 + $0x58] sm:$0xff] %vm1531, %v1517
      %1544 = vst.msk [vmem:[%s170 + $0x60] sm:$0xff] %vm1531, %v1518
      %1545 = vst.msk [vmem:[%s170 + $0x68] sm:$0xff] %vm1531, %v1519
      %1546 = vst.msk [vmem:[%s170 + $0x70] sm:$0xff] %vm1531, %v1520
      %1547 = vst.msk [vmem:[%s170 + $0x78] sm:$0xff] %vm1531, %v1521
      %1548 = vst.msk [vmem:[%s170 + $0x80] sm:$0xff] %vm1531, %v1522
      %1549 = vst.msk [vmem:[%s170 + $0x88] sm:$0xff] %vm1531, %v1523
      %1550 = vst.msk [vmem:[%s170 + $0x90] sm:$0xff] %vm1531, %v1524
      %1551 = vst.msk [vmem:[%s170 + $0x98] sm:$0xff] %vm1531, %v1525
      %1552 = vst.msk [vmem:[%s170 + $0xa0] sm:$0xff] %vm1531, %v1526
      %1553 = vst.msk [vmem:[%s170 + $0xa8] sm:$0xff] %vm1531, %v1527
      %1554 = vst.msk [vmem:[%s170 + $0xb0] sm:$0xff] %vm1531, %v1528
      %1555 = vst.msk [vmem:[%s170 + $0xb8] sm:$0xff] %vm1531, %v1529
      %vm1556 = vcmask 44032
      %1557 = vst.msk [vmem:[%s170 + $0xc0] sm:$0xf] %vm1556, %v1530
      %p1558 = scmp.lt.s32.totalorder %s14, 1
      %s1559 = scalar_select %p1558, %s14, 1
      %s1560 = smul.addr %s1559, 25
      %s1561 = smul.addr %s1560, 8
      %s1562 = scalar_lea.vmem %s3, %s1561
      // Predicated region
      $region33: #{lenet_cifar_forward.3} parent=31 // pred_check
        %p1563 = pneg %p100
      $region34: #{lenet_cifar_forward.3} parent=31 // pred_check_branch
        %1565 = sbr.rel (%p1563) target = $region36
      $region35: #{lenet_cifar_forward.3} parent=31 // pred_region
        _
      $region36: #{lenet_cifar_forward.3} parent=31 // pred_fallthru
        _
    $region32: #{lenet_cifar_forward.3} parent=5 // pred_fallthru
      _
    %p1566 = scmp.le.s32.totalorder 2, %s9
    // Predicated region
    $region37: #{lenet_cifar_forward.3} parent=5 // pred_check
      %p1567 = pneg %p1566
    $region38: #{lenet_cifar_forward.3} parent=5 // pred_check_branch
      %1569 = sbr.rel (%p1567) target = $region40
    $region39: #{lenet_cifar_forward.3} parent=5 // pred_region
      %s1570 = ssub.s32 %s9, 2
      // Predicated region
      $region41: #{lenet_cifar_forward.3} parent=39 // pred_check
        %p1571 = pneg %p106
      $region42: #{lenet_cifar_forward.3} parent=39 // pred_check_branch
        %1573 = sbr.rel (%p1571) target = $region44
      $region43: #{lenet_cifar_forward.3} parent=39 // pred_region
        %p1574 = scmp.lt.s32.totalorder %s15, 1
        %s1575 = scalar_select %p1574, %s15, 1
        %s1576 = smul.addr %s1575, 25
        %s1577 = smul.addr %s1576, 8
        %s1578 = scalar_lea.vmem %s3, %s1577
      $region44: #{lenet_cifar_forward.3} parent=39 // pred_fallthru
        _
    $region40: #{lenet_cifar_forward.3} parent=5 // pred_fallthru
      _
  $region6: #{lenet_cifar_forward.3} parent=0 // loop_footer
    %s13 = sadd.s32 1, %s9
  $region7: #{lenet_cifar_forward.3} parent=0 // loop_footer_branch
    %8 = sbr.rel target = $region3
  $region8: #{lenet_cifar_forward.3} parent=0 // loop_exit
    _

// kernel: lenet_cifar_forward.4
$region0: #{lenet_cifar_forward.4}
  #allocation0 [shape = 'u32[]', space=smem, size = 0x4, offset = 0x4, fixed_abs, tag = 'smem constant byte address 0x4 - core index']
  #allocation1 [shape = 'u32[144,128]{1,0:T(1,128)}', space=vmem, size = 0x12000, scoped, tag = 'internal scratch']
  %s0 = inlined_call_operand.vmem [shape: f32[2,4,25,150], index: 0, kind: input, shape index: {}]
  %s1 = inlined_call_operand.vmem [shape: f32[150,16], index: 1, kind: input, shape index: {}]
  %s2 = inlined_call_operand.vmem [shape: f32[1,16], index: 2, kind: input, shape index: {}]
  %s3 = inlined_call_operand.vmem [shape: f32[2,25,16], index: 3, kind: output, shape index: {}]
  %s4 = sld [smem:[#allocation0]]
  $region45: #{lenet_cifar_forward.4} parent=0
    _
  %s6 = ssub.s32 1, %s4
  %s7 = scalar_select 0, %s6, %s4
  loop: start=0, step=1, limit=4
  $region2: #{lenet_cifar_forward.4} parent=0 // loop_pre_header
    _
  $region3: #{lenet_cifar_forward.4} parent=0 // loop_header
    %s9 = sphi 0, %s13
    %p10 = scmp.ge.s32.totalorder %s9, 4
    %s19 = sphi 0, %s21
    %s22 = sphi 0, %s19
    %s23 = sphi 0, %s22
    %s39 = sphi 0, %s23
    %s43 = sphi 0, %s43
    %s45 = sphi 0, %s43
    %s46 = sphi 0, %s45
    %s60 = sphi 0, %s46
    %s64 = sphi 0, %s64
    %s66 = sphi 0, %s64
    %s67 = sphi 0, %s66
    %s81 = sphi 0, %s67
    %s87 = sphi 0, %s89
    %s90 = sphi 0, %s87
    %s91 = sphi 0, %s90
    %s107 = sphi 0, %s91
  $region4: #{lenet_cifar_forward.4} parent=0 // loop_header_branch
    %12 = sbr.rel (%p10) target = $region8
  $region5: #{lenet_cifar_forward.4} parent=0 // loop_body
    %s14 = ssub.s32 %s9, 1
    %s15 = ssub.s32 %s9, 2
    %s16 = sadd.s32 %s9, 1
    %s17 = ssub.s32 %s9, %s16
    %p18 = scmp.eq.s32.totalorder %s17, 0
    %s20 = sadd.s32 %s19, 1
    %s21 = scalar_select %p18, %s19, %s20
    %p24 = pneg %p18
    %p25 = scmp.eq.s32.totalorder %s9, 1
    %p26 = por %p24, %p25
    %p27 = scmp.ne.s32.totalorder %s19, %s22
    %p28 = scmp.eq.s32.totalorder %s9, 0
    %p29 = por %p27, %p28
    %p30 = scmp.ne.s32.totalorder %s19, %s22
    %p31 = scmp.eq.s32.totalorder %s14, 1
    %p32 = por %p30, %p31
    %p33 = scmp.ne.s32.totalorder %s22, %s23
    %p34 = scmp.eq.s32.totalorder %s14, 0
    %p35 = por %p33, %p34
    %p36 = scmp.ne.s32.totalorder %s22, %s23
    %p37 = scmp.eq.s32.totalorder %s15, 1
    %p38 = por %p36, %p37
    %p40 = scmp.ne.s32.totalorder %s23, %s39
    %p41 = scmp.eq.s32.totalorder %s15, 0
    %p42 = por %p40, %p41
    %s44 = sadd.s32 %s43, 1
    %p47 = scmp.eq.s32.totalorder %s9, 1
    %p48 = scmp.ne.s32.totalorder %s43, %s45
    %p49 = scmp.eq.s32.totalorder %s9, 0
    %p50 = por %p48, %p49
    %p51 = scmp.ne.s32.totalorder %s43, %s45
    %p52 = scmp.eq.s32.totalorder %s14, 1
    %p53 = por %p51, %p52
    %p54 = scmp.ne.s32.totalorder %s45, %s46
    %p55 = scmp.eq.s32.totalorder %s14, 0
    %p56 = por %p54, %p55
    %p57 = scmp.ne.s32.totalorder %s45, %s46
    %p58 = scmp.eq.s32.totalorder %s15, 1
    %p59 = por %p57, %p58
    %p61 = scmp.ne.s32.totalorder %s46, %s60
    %p62 = scmp.eq.s32.totalorder %s15, 0
    %p63 = por %p61, %p62
    %s65 = sadd.s32 %s64, 1
    %p68 = scmp.eq.s32.totalorder %s9, 1
    %p69 = scmp.ne.s32.totalorder %s64, %s66
    %p70 = scmp.eq.s32.totalorder %s9, 0
    %p71 = por %p69, %p70
    %p72 = scmp.ne.s32.totalorder %s64, %s66
    %p73 = scmp.eq.s32.totalorder %s14, 1
    %p74 = por %p72, %p73
    %p75 = scmp.ne.s32.totalorder %s66, %s67
    %p76 = scmp.eq.s32.totalorder %s14, 0
    %p77 = por %p75, %p76
    %p78 = scmp.ne.s32.totalorder %s66, %s67
    %p79 = scmp.eq.s32.totalorder %s15, 1
    %p80 = por %p78, %p79
    %p82 = scmp.ne.s32.totalorder %s67, %s81
    %p83 = scmp.eq.s32.totalorder %s15, 0
    %p84 = por %p82, %p83
    %s85 = ssub.s32 %s9, %s16
    %p86 = scmp.eq.s32.totalorder %s85, 0
    %s88 = sadd.s32 %s87, 1
    %s89 = scalar_select %p86, %s87, %s88
    %p92 = pneg %p86
    %p93 = scmp.eq.s32.totalorder %s9, 1
    %p94 = por %p92, %p93
    %p95 = scmp.ne.s32.totalorder %s87, %s90
    %p96 = scmp.eq.s32.totalorder %s9, 0
    %p97 = por %p95, %p96
    %p98 = scmp.ne.s32.totalorder %s87, %s90
    %p99 = scmp.eq.s32.totalorder %s14, 1
    %p100 = por %p98, %p99
    %p101 = scmp.ne.s32.totalorder %s90, %s91
    %p102 = scmp.eq.s32.totalorder %s14, 0
    %p103 = por %p101, %p102
    %p104 = scmp.ne.s32.totalorder %s90, %s91
    %p105 = scmp.eq.s32.totalorder %s15, 1
    %p106 = por %p104, %p105
    %p108 = scmp.ne.s32.totalorder %s91, %s107
    %p109 = scmp.eq.s32.totalorder %s15, 0
    %p110 = por %p108, %p109
    %p111 = scmp.le.s32.totalorder 1, %s9
    %p112 = scmp.lt.s32.totalorder %s9, 3
    %p113 = pnand %p111, %p112
    %p114 = pneg %p113
    // Predicated region
    $region9: #{lenet_cifar_forward.4} parent=5 // pred_check
      _
    $region10: #{lenet_cifar_forward.4} parent=5 // pred_check_branch
      %116 = sbr.rel (%p113) target = $region12
    $region11: #{lenet_cifar_forward.4} parent=5 // pred_region
      %s117 = ssub.s32 %s9, 1
      // Predicated region
      $region13: #{lenet_cifar_forward.4} parent=11 // pred_check
        %p118 = pneg %p56
      $region14: #{lenet_cifar_forward.4} parent=11 // pred_check_branch
        %120 = sbr.rel (%p118) target = $region16
      $region15: #{lenet_cifar_forward.4} parent=11 // pred_region
        _
      $region16: #{lenet_cifar_forward.4} parent=11 // pred_fallthru
        _
      // Predicated region
      $region17: #{lenet_cifar_forward.4} parent=11 // pred_check
        %p121 = pneg %p77
      $region18: #{lenet_cifar_forward.4} parent=11 // pred_check_branch
        %123 = sbr.rel (%p121) target = $region20
      $region19: #{lenet_cifar_forward.4} parent=11 // pred_region
        _
      $region20: #{lenet_cifar_forward.4} parent=11 // pred_fallthru
        _
    $region12: #{lenet_cifar_forward.4} parent=5 // pred_fallthru
      _
    %p124 = scmp.lt.s32.totalorder %s9, 2
    // Predicated region
    $region21: #{lenet_cifar_forward.4} parent=5 // pred_check
      %p125 = pneg %p124
    $region22: #{lenet_cifar_forward.4} parent=5 // pred_check_branch
      %127 = sbr.rel (%p125) target = $region24
    $region23: #{lenet_cifar_forward.4} parent=5 // pred_region
      // Predicated region
      $region25: #{lenet_cifar_forward.4} parent=23 // pred_check
        %p128 = pneg %p29
      $region26: #{lenet_cifar_forward.4} parent=23 // pred_check_branch
        %130 = sbr.rel (%p128) target = $region28
      $region27: #{lenet_cifar_forward.4} parent=23 // pred_region
        %p131 = scmp.lt.s32.totalorder %s9, 1
        %s132 = scalar_select %p131, %s9, 1
        %s133 = smul.addr %s132, 32
        %s134 = smul.addr %s133, 8
        %s135 = scalar_lea.vmem %s0, %s134
      $region28: #{lenet_cifar_forward.4} parent=23 // pred_fallthru
        _
    $region24: #{lenet_cifar_forward.4} parent=5 // pred_fallthru
      _
    %p136 = scmp.le.s32.totalorder 1, %s9
    %p137 = scmp.lt.s32.totalorder %s9, 3
    %p138 = pnand %p136, %p137
    %p139 = pneg %p138
    // Predicated region
    $region29: #{lenet_cifar_forward.4} parent=5 // pred_check
      _
    $region30: #{lenet_cifar_forward.4} parent=5 // pred_check_branch
      %141 = sbr.rel (%p138) target = $region32
    $region31: #{lenet_cifar_forward.4} parent=5 // pred_region
      %s142 = ssub.s32 %s9, 1
      %p143 = scmp.lt.s32.totalorder %s14, 1
      %s144 = scalar_select %p143, %s14, 1
      %s145 = smul.addr %s144, 32
      %s146 = smul.addr %s145, 8
      %s147 = scalar_lea.vmem %s0, %s146
      %p148 = pneg %p35
      %p149 = pneg %p32
      %p150 = pneg %p56
      %p151 = pneg %p53
      %p152 = pneg %p77
      %p153 = pneg %p74
      %p154 = pneg %p103
      %p155 = pneg %p100
      %p156 = scmp.lt.s32.totalorder %s14, 1
      %s157 = scalar_select %p156, %s14, 1
      %s158 = smul.addr %s157, 4
      %s159 = smul.addr %s158, 8
      %s160 = scalar_lea.vmem %s3, %s159
      %p161 = scmp.lt.s32.totalorder %s14, 1
      %s162 = scalar_select %p161, %s14, 1
      %s163 = smul.addr %s162, 32
      %s164 = smul.addr %s163, 8
      %s165 = scalar_lea.vmem %s0, %s164
      %p166 = scmp.lt.s32.totalorder %s14, 1
      %s167 = scalar_select %p166, %s14, 1
      %s168 = smul.addr %s167, 4
      %s169 = smul.addr %s168, 8
      %s170 = scalar_lea.vmem %s3, %s169
      %v171 = vld [vmem:[%s1] sm:$0xff]
      %v172 = vld [vmem:[%s1 + $0x8] sm:$0xff]
      %v173 = vld [vmem:[%s1 + $0x10] sm:$0xff]
      %v174 = vld [vmem:[%s1 + $0x18] sm:$0xff]
      %v175 = vld [vmem:[%s1 + $0x20] sm:$0xff]
      %v176 = vld [vmem:[%s1 + $0x28] sm:$0xff]
      %v177 = vld [vmem:[%s1 + $0x30] sm:$0xff]
      %v178 = vld [vmem:[%s1 + $0x38] sm:$0xff]
      %v179 = vld [vmem:[%s1 + $0x40] sm:$0xff]
      %v180 = vld [vmem:[%s1 + $0x48] sm:$0xff]
      %v181 = vld [vmem:[%s1 + $0x50] sm:$0xff]
      %v182 = vld [vmem:[%s1 + $0x58] sm:$0xff]
      %v183 = vld [vmem:[%s1 + $0x60] sm:$0xff]
      %v184 = vld [vmem:[%s1 + $0x68] sm:$0xff]
      %v185 = vld [vmem:[%s1 + $0x70] sm:$0xff]
      %v186 = vld [vmem:[%s1 + $0x78] sm:$0xff]
      %v187 = vld [vmem:[%s1 + $0x80] sm:$0xff]
      %v188 = vld [vmem:[%s1 + $0x88] sm:$0xff]
      %v189 = vld [vmem:[%s1 + $0x90] sm:$0x3f]
      %v190 = vld [vmem:[%s2] sm:$0x1]
      %v191 = vld [vmem:[%s165] sm:$0xff]
      %v192 = vld [vmem:[%s165 + $0x8] sm:$0xff]
      %v193 = vld [vmem:[%s165 + $0x10] sm:$0xff]
      %v194 = vld [vmem:[%s165 + $0x18] sm:$0xff]
      %v195 = vld [vmem:[%s165 + $0x20] sm:$0xff]
      %v196 = vld [vmem:[%s165 + $0x28] sm:$0xff]
      %v197 = vld [vmem:[%s165 + $0x30] sm:$0x1]
      %v198 = vld [vmem:[%s165 + $0x38] sm:$0x1]
      %v200 = vlaneseq
      %v201 = vshrl.u32 %v200, 7
      %v202 = vsub.s32 0, %v201
      %v203 = vrot.slane %v190, %v202
      %vm205 = vcmask 179200
      %v207 = vsel %vm205, %v192, 0
      %v210 = vsel %vm205, %v194, 0
      %v213 = vsel %vm205, %v196, 0
      %v216 = vsel %vm205, %v198, 0
      %vm218 = vcmask 1045504
      %v220 = vsel %vm218, %v189, 0
      %222 = vmatprep.subr.mxu0 0.0
      %223 = vmatpush1.msra.mxu0 %v171
      %224 = vmatprep.subr.mxu0 0.0
      %225 = vmatpush1.msra.mxu0 %v172
      %226 = vmatprep.subr.mxu0 0.0
      %227 = vmatpush1.msra.mxu0 %v173
      %228 = vmatprep.subr.mxu0 0.0
      %229 = vmatpush1.msra.mxu0 %v174
      %230 = vmatprep.subr.mxu0 0.0
      %231 = vmatpush1.msra.mxu0 %v175
      %232 = vmatprep.subr.mxu0 0.0
      %233 = vmatpush1.msra.mxu0 %v176
      %234 = vmatprep.subr.mxu0 0.0
      %235 = vmatpush1.msra.mxu0 %v177
      %236 = vmatprep.subr.mxu0 0.0
      %237 = vmatpush1.msra.mxu0 %v178
      %238 = vmatprep.subr.mxu0 0.0
      %239 = vmatpush1.msra.mxu0 %v179
      %240 = vmatprep.subr.mxu0 0.0
      %241 = vmatpush1.msra.mxu0 %v180
      %242 = vmatprep.subr.mxu0 0.0
      %243 = vmatpush1.msra.mxu0 %v181
      %244 = vmatprep.subr.mxu0 0.0
      %245 = vmatpush1.msra.mxu0 %v182
      %246 = vmatprep.subr.mxu0 0.0
      %247 = vmatpush1.msra.mxu0 %v183
      %248 = vmatprep.subr.mxu0 0.0
      %249 = vmatpush1.msra.mxu0 %v184
      %250 = vmatprep.subr.mxu0 0.0
      %251 = vmatpush1.msra.mxu0 %v185
      %252 = vmatprep.subr.mxu0 0.0
      %253 = vmatpush1.msra.mxu0 %v186
      %254 = vmatprep.subr.mxu0 0.0
      %255 = vmatpush1.msra.mxu0 %v187
      %256 = vmatprep.subr.mxu0 0.0
      %257 = vmatpush1.msra.mxu0 %v188
      %258 = vmatprep.subr.mxu0 0.0
      %259 = vmatpush1.msra.mxu0 %v220
      %260 = vmatprep.subr.mxu0 0.0
      %261 = vmatpush1.msra.mxu0 0.0
      %262 = vmatprep.subr.mxu0 0.0
      %263 = vmatpush1.msra.mxu0 0.0
      %264 = vmatprep.subr.mxu0 0.0
      %265 = vmatpush1.msra.mxu0 0.0
      %266 = vmatprep.subr.mxu0 0.0
      %267 = vmatpush1.msra.mxu0 0.0
      %268 = vmatprep.subr.mxu0 0.0
      %269 = vmatpush1.msra.mxu0 0.0
      %270 = vmatprep.subr.mxu0 0.0
      %271 = vmatpush1.msra.mxu0 0.0
      %272 = vmatprep.subr.mxu0 0.0
      %273 = vmatpush1.msra.mxu0 0.0
      %274 = vmatprep.subr.mxu0 0.0
      %275 = vmatpush1.msra.mxu0 0.0
      %276 = vmatprep.subr.mxu0 0.0
      %277 = vmatpush1.msra.mxu0 0.0
      %278 = vmatprep.subr.mxu0 0.0
      %279 = vmatpush1.msra.mxu0 0.0
      %280 = vmatprep.subr.mxu0 0.0
      %281 = vmatpush1.msra.mxu0 0.0
      %282 = vmatprep.subr.mxu0 0.0
      %283 = vmatpush1.msra.mxu0 0.0
      %284 = vmatprep.subr.mxu0 0.0
      %285 = vmatpush1.msra.mxu0 0.0
      %286 = vmatprep.mubr.f32.mxu0 %v207
      %287 = vmatmul.mubr.f32.gmra.mrb[0].mxu0 %v191
      %v288 = vpop.f32.mrb[0].mxu0
      %v289 = vadd.f32 %v203, %v288
      %v290 = vpop.f32.mrb[0].mxu0
      %291 = vmatprep.mubr.f32.mxu0 %v210
      %292 = vmatmul.mubr.f32.gmra.mrb[0].mxu0 %v193
      %v293 = vpop.f32.mrb[0].mxu0
      %v294 = vadd.f32 %v203, %v293
      %v295 = vpop.f32.mrb[0].mxu0
      %296 = vmatprep.mubr.f32.mxu0 %v213
      %297 = vmatmul.mubr.f32.gmra.mrb[0].mxu0 %v195
      %v298 = vpop.f32.mrb[0].mxu0
      %v299 = vadd.f32 %v203, %v298
      %v300 = vpop.f32.mrb[0].mxu0
      %301 = vmatprep.mubr.f32.mxu0 %v216
      %302 = vmatmul.mubr.f32.gmra.mrb[0].mxu0 %v197
      %v303 = vpop.f32.mrb[0].mxu0
      %v304 = vadd.f32 %v203, %v303
      %v305 = vpop.f32.mrb[0].mxu0
      %306 = vdwg.mxu0
      %v307 = vmax.f32 %v289, 0.0
      %v308 = vmax.f32 %v294, 0.0
      %v309 = vmax.f32 %v299, 0.0
      %v310 = vmax.f32 %v304, 0.0
      %s311 = scalar_lea.vmem %s165, 64
      %v312 = vld [vmem:[%s311] sm:$0xff]
      %v313 = vld [vmem:[%s311 + $0x8] sm:$0xff]
      %v314 = vld [vmem:[%s311 + $0x10] sm:$0xff]
      %v315 = vld [vmem:[%s311 + $0x18] sm:$0xff]
      %v316 = vld [vmem:[%s311 + $0x20] sm:$0xff]
      %v317 = vld [vmem:[%s311 + $0x28] sm:$0xff]
      %v318 = vld [vmem:[%s311 + $0x30] sm:$0x1]
      %v319 = vld [vmem:[%s311 + $0x38] sm:$0x1]
      %v321 = vsel %vm205, %v313, 0
      %v324 = vsel %vm205, %v315, 0
      %v327 = vsel %vm205, %v317, 0
      %v330 = vsel %vm205, %v319, 0
      %332 = vmatprep.subr.mxu0 0.0
      %333 = vmatpush1.msra.mxu0 %v171
      %334 = vmatprep.subr.mxu0 0.0
      %335 = vmatpush1.msra.mxu0 %v172
      %336 = vmatprep.subr.mxu0 0.0
      %337 = vmatpush1.msra.mxu0 %v173
      %338 = vmatprep.subr.mxu0 0.0
      %339 = vmatpush1.msra.mxu0 %v174
      %340 = vmatprep.subr.mxu0 0.0
      %341 = vmatpush1.msra.mxu0 %v175
      %342 = vmatprep.subr.mxu0 0.0
      %343 = vmatpush1.msra.mxu0 %v176
      %344 = vmatprep.subr.mxu0 0.0
      %345 = vmatpush1.msra.mxu0 %v177
      %346 = vmatprep.subr.mxu0 0.0
      %347 = vmatpush1.msra.mxu0 %v178
      %348 = vmatprep.subr.mxu0 0.0
      %349 = vmatpush1.msra.mxu0 %v179
      %350 = vmatprep.subr.mxu0 0.0
      %351 = vmatpush1.msra.mxu0 %v180
      %352 = vmatprep.subr.mxu0 0.0
      %353 = vmatpush1.msra.mxu0 %v181
      %354 = vmatprep.subr.mxu0 0.0
      %355 = vmatpush1.msra.mxu0 %v182
      %356 = vmatprep.subr.mxu0 0.0
      %357 = vmatpush1.msra.mxu0 %v183
      %358 = vmatprep.subr.mxu0 0.0
      %359 = vmatpush1.msra.mxu0 %v184
      %360 = vmatprep.subr.mxu0 0.0
      %361 = vmatpush1.msra.mxu0 %v185
      %362 = vmatprep.subr.mxu0 0.0
      %363 = vmatpush1.msra.mxu0 %v186
      %364 = vmatprep.subr.mxu0 0.0
      %365 = vmatpush1.msra.mxu0 %v187
      %366 = vmatprep.subr.mxu0 0.0
      %367 = vmatpush1.msra.mxu0 %v188
      %368 = vmatprep.subr.mxu0 0.0
      %369 = vmatpush1.msra.mxu0 %v220
      %370 = vmatprep.subr.mxu0 0.0
      %371 = vmatpush1.msra.mxu0 0.0
      %372 = vmatprep.subr.mxu0 0.0
      %373 = vmatpush1.msra.mxu0 0.0
      %374 = vmatprep.subr.mxu0 0.0
      %375 = vmatpush1.msra.mxu0 0.0
      %376 = vmatprep.subr.mxu0 0.0
      %377 = vmatpush1.msra.mxu0 0.0
      %378 = vmatprep.subr.mxu0 0.0
      %379 = vmatpush1.msra.mxu0 0.0
      %380 = vmatprep.subr.mxu0 0.0
      %381 = vmatpush1.msra.mxu0 0.0
      %382 = vmatprep.subr.mxu0 0.0
      %383 = vmatpush1.msra.mxu0 0.0
      %384 = vmatprep.subr.mxu0 0.0
      %385 = vmatpush1.msra.mxu0 0.0
      %386 = vmatprep.subr.mxu0 0.0
      %387 = vmatpush1.msra.mxu0 0.0
      %388 = vmatprep.subr.mxu0 0.0
      %389 = vmatpush1.msra.mxu0 0.0
      %390 = vmatprep.subr.mxu0 0.0
      %391 = vmatpush1.msra.mxu0 0.0
      %392 = vmatprep.subr.mxu0 0.0
      %393 = vmatpush1.msra.mxu0 0.0
      %394 = vmatprep.subr.mxu0 0.0
      %395 = vmatpush1.msra.mxu0 0.0
      %396 = vmatprep.mubr.f32.mxu0 %v321
      %397 = vmatmul.mubr.f32.gmra.mrb[0].mxu0 %v312
      %v398 = vpop.f32.mrb[0].mxu0
      %v399 = vadd.f32 %v203, %v398
      %v400 = vpop.f32.mrb[0].mxu0
      %401 = vmatprep.mubr.f32.mxu0 %v324
      %402 = vmatmul.mubr.f32.gmra.mrb[0].mxu0 %v314
      %v403 = vpop.f32.mrb[0].mxu0
      %v404 = vadd.f32 %v203, %v403
      %v405 = vpop.f32.mrb[0].mxu0
      %406 = vmatprep.mubr.f32.mxu0 %v327
      %407 = vmatmul.mubr.f32.gmra.mrb[0].mxu0 %v316
      %v408 = vpop.f32.mrb[0].mxu0
      %v409 = vadd.f32 %v203, %v408
      %v410 = vpop.f32.mrb[0].mxu0
      %411 = vmatprep.mubr.f32.mxu0 %v330
      %412 = vmatmul.mubr.f32.gmra.mrb[0].mxu0 %v318
      %v413 = vpop.f32.mrb[0].mxu0
      %v414 = vadd.f32 %v203, %v413
      %v415 = vpop.f32.mrb[0].mxu0
      %416 = vdwg.mxu0
      %v417 = vmax.f32 %v399, 0.0
      %v418 = vmax.f32 %v404, 0.0
      %v419 = vmax.f32 %v409, 0.0
      %v420 = vmax.f32 %v414, 0.0
      %v421 = vmax.f32 %v307, %v417
      %v422 = vmax.f32 %v308, %v418
      %v423 = vmax.f32 %v309, %v419
      %v424 = vmax.f32 %v310, %v420
      %s425 = scalar_lea.vmem %s165, 128
      %v426 = vld [vmem:[%s425] sm:$0xff]
      %v427 = vld [vmem:[%s425 + $0x8] sm:$0xff]
      %v428 = vld [vmem:[%s425 + $0x10] sm:$0xff]
      %v429 = vld [vmem:[%s425 + $0x18] sm:$0xff]
      %v430 = vld [vmem:[%s425 + $0x20] sm:$0xff]
      %v431 = vld [vmem:[%s425 + $0x28] sm:$0xff]
      %v432 = vld [vmem:[%s425 + $0x30] sm:$0x1]
      %v433 = vld [vmem:[%s425 + $0x38] sm:$0x1]
      %v435 = vsel %vm205, %v427, 0
      %v438 = vsel %vm205, %v429, 0
      %v441 = vsel %vm205, %v431, 0
      %v444 = vsel %vm205, %v433, 0
      %446 = vmatprep.subr.mxu0 0.0
      %447 = vmatpush1.msra.mxu0 %v171
      %448 = vmatprep.subr.mxu0 0.0
      %449 = vmatpush1.msra.mxu0 %v172
      %450 = vmatprep.subr.mxu0 0.0
      %451 = vmatpush1.msra.mxu0 %v173
      %452 = vmatprep.subr.mxu0 0.0
      %453 = vmatpush1.msra.mxu0 %v174
      %454 = vmatprep.subr.mxu0 0.0
      %455 = vmatpush1.msra.mxu0 %v175
      %456 = vmatprep.subr.mxu0 0.0
      %457 = vmatpush1.msra.mxu0 %v176
      %458 = vmatprep.subr.mxu0 0.0
      %459 = vmatpush1.msra.mxu0 %v177
      %460 = vmatprep.subr.mxu0 0.0
      %461 = vmatpush1.msra.mxu0 %v178
      %462 = vmatprep.subr.mxu0 0.0
      %463 = vmatpush1.msra.mxu0 %v179
      %464 = vmatprep.subr.mxu0 0.0
      %465 = vmatpush1.msra.mxu0 %v180
      %466 = vmatprep.subr.mxu0 0.0
      %467 = vmatpush1.msra.mxu0 %v181
      %468 = vmatprep.subr.mxu0 0.0
      %469 = vmatpush1.msra.mxu0 %v182
      %470 = vmatprep.subr.mxu0 0.0
      %471 = vmatpush1.msra.mxu0 %v183
      %472 = vmatprep.subr.mxu0 0.0
      %473 = vmatpush1.msra.mxu0 %v184
      %474 = vmatprep.subr.mxu0 0.0
      %475 = vmatpush1.msra.mxu0 %v185
      %476 = vmatprep.subr.mxu0 0.0
      %477 = vmatpush1.msra.mxu0 %v186
      %478 = vmatprep.subr.mxu0 0.0
      %479 = vmatpush1.msra.mxu0 %v187
      %480 = vmatprep.subr.mxu0 0.0
      %481 = vmatpush1.msra.mxu0 %v188
      %482 = vmatprep.subr.mxu0 0.0
      %483 = vmatpush1.msra.mxu0 %v220
      %484 = vmatprep.subr.mxu0 0.0
      %485 = vmatpush1.msra.mxu0 0.0
      %486 = vmatprep.subr.mxu0 0.0
      %487 = vmatpush1.msra.mxu0 0.0
      %488 = vmatprep.subr.mxu0 0.0
      %489 = vmatpush1.msra.mxu0 0.0
      %490 = vmatprep.subr.mxu0 0.0
      %491 = vmatpush1.msra.mxu0 0.0
      %492 = vmatprep.subr.mxu0 0.0
      %493 = vmatpush1.msra.mxu0 0.0
      %494 = vmatprep.subr.mxu0 0.0
      %495 = vmatpush1.msra.mxu0 0.0
      %496 = vmatprep.subr.mxu0 0.0
      %497 = vmatpush1.msra.mxu0 0.0
      %498 = vmatprep.subr.mxu0 0.0
      %499 = vmatpush1.msra.mxu0 0.0
      %500 = vmatprep.subr.mxu0 0.0
      %501 = vmatpush1.msra.mxu0 0.0
      %502 = vmatprep.subr.mxu0 0.0
      %503 = vmatpush1.msra.mxu0 0.0
      %504 = vmatprep.subr.mxu0 0.0
      %505 = vmatpush1.msra.mxu0 0.0
      %506 = vmatprep.subr.mxu0 0.0
      %507 = vmatpush1.msra.mxu0 0.0
      %508 = vmatprep.subr.mxu0 0.0
      %509 = vmatpush1.msra.mxu0 0.0
      %510 = vmatprep.mubr.f32.mxu0 %v435
      %511 = vmatmul.mubr.f32.gmra.mrb[0].mxu0 %v426
      %v512 = vpop.f32.mrb[0].mxu0
      %v513 = vadd.f32 %v203, %v512
      %v514 = vpop.f32.mrb[0].mxu0
      %515 = vmatprep.mubr.f32.mxu0 %v438
      %516 = vmatmul.mubr.f32.gmra.mrb[0].mxu0 %v428
      %v517 = vpop.f32.mrb[0].mxu0
      %v518 = vadd.f32 %v203, %v517
      %v519 = vpop.f32.mrb[0].mxu0
      %520 = vmatprep.mubr.f32.mxu0 %v441
      %521 = vmatmul.mubr.f32.gmra.mrb[0].mxu0 %v430
      %v522 = vpop.f32.mrb[0].mxu0
      %v523 = vadd.f32 %v203, %v522
      %v524 = vpop.f32.mrb[0].mxu0
      %525 = vmatprep.mubr.f32.mxu0 %v444
      %526 = vmatmul.mubr.f32.gmra.mrb[0].mxu0 %v432
      %v527 = vpop.f32.mrb[0].mxu0
      %v528 = vadd.f32 %v203, %v527
      %v529 = vpop.f32.mrb[0].mxu0
      %530 = vdwg.mxu0
      %v531 = vmax.f32 %v513, 0.0
      %v532 = vmax.f32 %v518, 0.0
      %v533 = vmax.f32 %v523, 0.0
      %v534 = vmax.f32 %v528, 0.0
      %s535 = scalar_lea.vmem %s165, 192
      %v536 = vld [vmem:[%s535] sm:$0xff]
      %v537 = vld [vmem:[%s535 + $0x8] sm:$0xff]
      %v538 = vld [vmem:[%s535 + $0x10] sm:$0xff]
      %v539 = vld [vmem:[%s535 + $0x18] sm:$0xff]
      %v540 = vld [vmem:[%s535 + $0x20] sm:$0xff]
      %v541 = vld [vmem:[%s535 + $0x28] sm:$0xff]
      %v542 = vld [vmem:[%s535 + $0x30] sm:$0x1]
      %v543 = vld [vmem:[%s535 + $0x38] sm:$0x1]
      %v545 = vsel %vm205, %v537, 0
      %v548 = vsel %vm205, %v539, 0
      %v551 = vsel %vm205, %v541, 0
      %v554 = vsel %vm205, %v543, 0
      %556 = vmatprep.subr.mxu0 0.0
      %557 = vmatpush1.msra.mxu0 %v171
      %558 = vmatprep.subr.mxu0 0.0
      %559 = vmatpush1.msra.mxu0 %v172
      %560 = vmatprep.subr.mxu0 0.0
      %561 = vmatpush1.msra.mxu0 %v173
      %562 = vmatprep.subr.mxu0 0.0
      %563 = vmatpush1.msra.mxu0 %v174
      %564 = vmatprep.subr.mxu0 0.0
      %565 = vmatpush1.msra.mxu0 %v175
      %566 = vmatprep.subr.mxu0 0.0
      %567 = vmatpush1.msra.mxu0 %v176
      %568 = vmatprep.subr.mxu0 0.0
      %569 = vmatpush1.msra.mxu0 %v177
      %570 = vmatprep.subr.mxu0 0.0
      %571 = vmatpush1.msra.mxu0 %v178
      %572 = vmatprep.subr.mxu0 0.0
      %573 = vmatpush1.msra.mxu0 %v179
      %574 = vmatprep.subr.mxu0 0.0
      %575 = vmatpush1.msra.mxu0 %v180
      %576 = vmatprep.subr.mxu0 0.0
      %577 = vmatpush1.msra.mxu0 %v181
      %578 = vmatprep.subr.mxu0 0.0
      %579 = vmatpush1.msra.mxu0 %v182
      %580 = vmatprep.subr.mxu0 0.0
      %581 = vmatpush1.msra.mxu0 %v183
      %582 = vmatprep.subr.mxu0 0.0
      %583 = vmatpush1.msra.mxu0 %v184
      %584 = vmatprep.subr.mxu0 0.0
      %585 = vmatpush1.msra.mxu0 %v185
      %586 = vmatprep.subr.mxu0 0.0
      %587 = vmatpush1.msra.mxu0 %v186
      %588 = vmatprep.subr.mxu0 0.0
      %589 = vmatpush1.msra.mxu0 %v187
      %590 = vmatprep.subr.mxu0 0.0
      %591 = vmatpush1.msra.mxu0 %v188
      %592 = vmatprep.subr.mxu0 0.0
      %593 = vmatpush1.msra.mxu0 %v220
      %594 = vmatprep.subr.mxu0 0.0
      %595 = vmatpush1.msra.mxu0 0.0
      %596 = vmatprep.subr.mxu0 0.0
      %597 = vmatpush1.msra.mxu0 0.0
      %598 = vmatprep.subr.mxu0 0.0
      %599 = vmatpush1.msra.mxu0 0.0
      %600 = vmatprep.subr.mxu0 0.0
      %601 = vmatpush1.msra.mxu0 0.0
      %602 = vmatprep.subr.mxu0 0.0
      %603 = vmatpush1.msra.mxu0 0.0
      %604 = vmatprep.subr.mxu0 0.0
      %605 = vmatpush1.msra.mxu0 0.0
      %606 = vmatprep.subr.mxu0 0.0
      %607 = vmatpush1.msra.mxu0 0.0
      %608 = vmatprep.subr.mxu0 0.0
      %609 = vmatpush1.msra.mxu0 0.0
      %610 = vmatprep.subr.mxu0 0.0
      %611 = vmatpush1.msra.mxu0 0.0
      %612 = vmatprep.subr.mxu0 0.0
      %613 = vmatpush1.msra.mxu0 0.0
      %614 = vmatprep.subr.mxu0 0.0
      %615 = vmatpush1.msra.mxu0 0.0
      %616 = vmatprep.subr.mxu0 0.0
      %617 = vmatpush1.msra.mxu0 0.0
      %618 = vmatprep.subr.mxu0 0.0
      %619 = vmatpush1.msra.mxu0 0.0
      %620 = vmatprep.mubr.f32.mxu0 %v545
      %621 = vmatmul.mubr.f32.gmra.mrb[0].mxu0 %v536
      %v622 = vpop.f32.mrb[0].mxu0
      %v623 = vadd.f32 %v203, %v622
      %v624 = vpop.f32.mrb[0].mxu0
      %625 = vmatprep.mubr.f32.mxu0 %v548
      %626 = vmatmul.mubr.f32.gmra.mrb[0].mxu0 %v538
      %v627 = vpop.f32.mrb[0].mxu0
      %v628 = vadd.f32 %v203, %v627
      %v629 = vpop.f32.mrb[0].mxu0
      %630 = vmatprep.mubr.f32.mxu0 %v551
      %631 = vmatmul.mubr.f32.gmra.mrb[0].mxu0 %v540
      %v632 = vpop.f32.mrb[0].mxu0
      %v633 = vadd.f32 %v203, %v632
      %v634 = vpop.f32.mrb[0].mxu0
      %635 = vmatprep.mubr.f32.mxu0 %v554
      %636 = vmatmul.mubr.f32.gmra.mrb[0].mxu0 %v542
      %v637 = vpop.f32.mrb[0].mxu0
      %v638 = vadd.f32 %v203, %v637
      %v639 = vpop.f32.mrb[0].mxu0
      %640 = vdwg.mxu0
      %v641 = vmax.f32 %v623, 0.0
      %v642 = vmax.f32 %v628, 0.0
      %v643 = vmax.f32 %v633, 0.0
      %v644 = vmax.f32 %v638, 0.0
      %v645 = vmax.f32 %v531, %v641
      %v646 = vmax.f32 %v532, %v642
      %v647 = vmax.f32 %v533, %v643
      %v648 = vmax.f32 %v534, %v644
      %v649 = vmax.f32 %v421, %v645
      %v650 = vmax.f32 %v422, %v646
      %v651 = vmax.f32 %v423, %v647
      %v652 = vmax.f32 %v424, %v648
      %vm653 = vcmask 130048
      %654 = vst.msk [vmem:[%s170] sm:$0xff] %vm653, %v649
      %655 = vst.msk [vmem:[%s170 + $0x8] sm:$0xff] %vm653, %v650
      %656 = vst.msk [vmem:[%s170 + $0x10] sm:$0xff] %vm653, %v651
      %vm657 = vcmask 122880
      %658 = vst.msk [vmem:[%s170 + $0x18] sm:$0x1] %vm657, %v652
      %p659 = scmp.lt.s32.totalorder %s14, 1
      %s660 = scalar_select %p659, %s14, 1
      %s661 = smul.addr %s660, 4
      %s662 = smul.addr %s661, 8
      %s663 = scalar_lea.vmem %s3, %s662
      // Predicated region
      $region33: #{lenet_cifar_forward.4} parent=31 // pred_check
        %p664 = pneg %p100
      $region34: #{lenet_cifar_forward.4} parent=31 // pred_check_branch
        %666 = sbr.rel (%p664) target = $region36
      $region35: #{lenet_cifar_forward.4} parent=31 // pred_region
        _
      $region36: #{lenet_cifar_forward.4} parent=31 // pred_fallthru
        _
    $region32: #{lenet_cifar_forward.4} parent=5 // pred_fallthru
      _
    %p667 = scmp.le.s32.totalorder 2, %s9
    // Predicated region
    $region37: #{lenet_cifar_forward.4} parent=5 // pred_check
      %p668 = pneg %p667
    $region38: #{lenet_cifar_forward.4} parent=5 // pred_check_branch
      %670 = sbr.rel (%p668) target = $region40
    $region39: #{lenet_cifar_forward.4} parent=5 // pred_region
      %s671 = ssub.s32 %s9, 2
      // Predicated region
      $region41: #{lenet_cifar_forward.4} parent=39 // pred_check
        %p672 = pneg %p106
      $region42: #{lenet_cifar_forward.4} parent=39 // pred_check_branch
        %674 = sbr.rel (%p672) target = $region44
      $region43: #{lenet_cifar_forward.4} parent=39 // pred_region
        %p675 = scmp.lt.s32.totalorder %s15, 1
        %s676 = scalar_select %p675, %s15, 1
        %s677 = smul.addr %s676, 4
        %s678 = smul.addr %s677, 8
        %s679 = scalar_lea.vmem %s3, %s678
      $region44: #{lenet_cifar_forward.4} parent=39 // pred_fallthru
        _
    $region40: #{lenet_cifar_forward.4} parent=5 // pred_fallthru
      _
  $region6: #{lenet_cifar_forward.4} parent=0 // loop_footer
    %s13 = sadd.s32 1, %s9
  $region7: #{lenet_cifar_forward.4} parent=0 // loop_footer_branch
    %8 = sbr.rel target = $region3
  $region8: #{lenet_cifar_forward.4} parent=0 // loop_exit
    _

// kernel: lenet_cifar_forward.5
$region0: #{lenet_cifar_forward.5}
  #allocation0 [shape = 'u32[]', space=smem, size = 0x4, offset = 0x4, fixed_abs, tag = 'smem constant byte address 0x4 - core index']
  #allocation1 [shape = 'u32[144,128]{1,0:T(1,128)}', space=vmem, size = 0x12000, scoped, tag = 'internal scratch']
  %s0 = inlined_call_operand.vmem [shape: f32[2,400], index: 0, kind: input, shape index: {}]
  %s1 = inlined_call_operand.vmem [shape: f32[400,120], index: 1, kind: input, shape index: {}]
  %s2 = inlined_call_operand.vmem [shape: f32[1,120], index: 2, kind: input, shape index: {}]
  %s3 = inlined_call_operand.vmem [shape: f32[120,84], index: 3, kind: input, shape index: {}]
  %s4 = inlined_call_operand.vmem [shape: f32[1,84], index: 4, kind: input, shape index: {}]
  %s5 = inlined_call_operand.vmem [shape: f32[84,25], index: 5, kind: input, shape index: {}]
  %s6 = inlined_call_operand.vmem [shape: f32[1,25], index: 6, kind: input, shape index: {}]
  %s7 = inlined_call_operand.vmem [shape: f32[25,2], index: 7, kind: input, shape index: {}]
  %s8 = inlined_call_operand.vmem [shape: f32[1,2], index: 8, kind: input, shape index: {}]
  %s9 = inlined_call_operand.hbm [shape: f32[2,2], index: 9, kind: output, shape index: {}]
  %s10 = sld [smem:[#allocation0]]
  $region46: #{lenet_cifar_forward.5} parent=0
    _
  %s12 = ssub.s32 1, %s10
  %s13 = scalar_select 0, %s12, %s10
  $region1: #{lenet_cifar_forward.5} parent=0
    #allocation2 [shape = 'u8[1024]{0}', space=vmem, size = 0x400, scoped, tag = 'output window, operand 0, single buffered']
    #allocation3 [shape = 's32[1]{0}', space=sflag, size = 0x4, scoped, tag = 'scoped memory for lenet_cifar_forward.5']
    %14 = vsyncpa [#allocation3], 0
    // Predicated region
    $region2: #{lenet_cifar_forward.5} parent=1 // pred_check
      _
    $region3: #{lenet_cifar_forward.5} parent=1 // pred_check_branch
      %16 = sbr.rel (0) target = $region5
    $region4: #{lenet_cifar_forward.5} parent=1 // pred_region
      _
    $region5: #{lenet_cifar_forward.5} parent=1 // pred_fallthru
      _
    // Predicated region
    $region6: #{lenet_cifar_forward.5} parent=1 // pred_check
      _
    $region7: #{lenet_cifar_forward.5} parent=1 // pred_check_branch
      %18 = sbr.rel (0) target = $region9
    $region8: #{lenet_cifar_forward.5} parent=1 // pred_region
      _
    $region9: #{lenet_cifar_forward.5} parent=1 // pred_fallthru
      _
    // Predicated region
    $region10: #{lenet_cifar_forward.5} parent=1 // pred_check
      _
    $region11: #{lenet_cifar_forward.5} parent=1 // pred_check_branch
      %20 = sbr.rel (0) target = $region13
    $region12: #{lenet_cifar_forward.5} parent=1 // pred_region
      _
    $region13: #{lenet_cifar_forward.5} parent=1 // pred_fallthru
      _
    // Predicated region
    $region14: #{lenet_cifar_forward.5} parent=1 // pred_check
      _
    $region15: #{lenet_cifar_forward.5} parent=1 // pred_check_branch
      %22 = sbr.rel (0) target = $region17
    $region16: #{lenet_cifar_forward.5} parent=1 // pred_region
      _
    $region17: #{lenet_cifar_forward.5} parent=1 // pred_fallthru
      _
    // Predicated region
    $region18: #{lenet_cifar_forward.5} parent=1 // pred_check
      _
    $region19: #{lenet_cifar_forward.5} parent=1 // pred_check_branch
      %24 = sbr.rel (0) target = $region21
    $region20: #{lenet_cifar_forward.5} parent=1 // pred_region
      _
    $region21: #{lenet_cifar_forward.5} parent=1 // pred_fallthru
      _
    // Predicated region
    $region22: #{lenet_cifar_forward.5} parent=1 // pred_check
      _
    $region23: #{lenet_cifar_forward.5} parent=1 // pred_check_branch
      %26 = sbr.rel (0) target = $region25
    $region24: #{lenet_cifar_forward.5} parent=1 // pred_region
      _
    $region25: #{lenet_cifar_forward.5} parent=1 // pred_fallthru
      _
    // Predicated region
    $region26: #{lenet_cifar_forward.5} parent=1 // pred_check
      _
    $region27: #{lenet_cifar_forward.5} parent=1 // pred_check_branch
      %28 = sbr.rel (0) target = $region29
    $region28: #{lenet_cifar_forward.5} parent=1 // pred_region
      _
    $region29: #{lenet_cifar_forward.5} parent=1 // pred_fallthru
      _
    // Predicated region
    $region30: #{lenet_cifar_forward.5} parent=1 // pred_check
      _
    $region31: #{lenet_cifar_forward.5} parent=1 // pred_check_branch
      %30 = sbr.rel (0) target = $region33
    $region32: #{lenet_cifar_forward.5} parent=1 // pred_region
      _
    $region33: #{lenet_cifar_forward.5} parent=1 // pred_fallthru
      _
    // Predicated region
    $region34: #{lenet_cifar_forward.5} parent=1 // pred_check
      _
    $region35: #{lenet_cifar_forward.5} parent=1 // pred_check_branch
      %32 = sbr.rel (0) target = $region37
    $region36: #{lenet_cifar_forward.5} parent=1 // pred_region
      _
    $region37: #{lenet_cifar_forward.5} parent=1 // pred_fallthru
      _
    %v33 = vld [vmem:[%s0] sm:$0xff]
    %v34 = vld [vmem:[%s1] sm:$0xff]
    %v35 = vld [vmem:[%s1 + $0x8] sm:$0xff]
    %v36 = vld [vmem:[%s1 + $0x10] sm:$0xff]
    %v37 = vld [vmem:[%s1 + $0x18] sm:$0xff]
    %v38 = vld [vmem:[%s1 + $0x20] sm:$0xff]
    %v39 = vld [vmem:[%s1 + $0x28] sm:$0xff]
    %v40 = vld [vmem:[%s1 + $0x30] sm:$0xff]
    %v41 = vld [vmem:[%s1 + $0x38] sm:$0xff]
    %v42 = vld [vmem:[%s1 + $0x40] sm:$0xff]
    %v43 = vld [vmem:[%s1 + $0x48] sm:$0xff]
    %v44 = vld [vmem:[%s1 + $0x50] sm:$0xff]
    %v45 = vld [vmem:[%s1 + $0x58] sm:$0xff]
    %v46 = vld [vmem:[%s1 + $0x60] sm:$0xff]
    %v47 = vld [vmem:[%s1 + $0x68] sm:$0xff]
    %v48 = vld [vmem:[%s1 + $0x70] sm:$0xff]
    %v49 = vld [vmem:[%s1 + $0x78] sm:$0xff]
    %v50 = vld [vmem:[%s1 + $0x80] sm:$0xff]
    %v51 = vld [vmem:[%s1 + $0x88] sm:$0xff]
    %v52 = vld [vmem:[%s1 + $0x90] sm:$0xff]
    %v53 = vld [vmem:[%s1 + $0x98] sm:$0xff]
    %v54 = vld [vmem:[%s1 + $0xa0] sm:$0xff]
    %v55 = vld [vmem:[%s1 + $0xa8] sm:$0xff]
    %v56 = vld [vmem:[%s1 + $0xb0] sm:$0xff]
    %v57 = vld [vmem:[%s1 + $0xb8] sm:$0xff]
    %v58 = vld [vmem:[%s1 + $0xc0] sm:$0xff]
    %v59 = vld [vmem:[%s1 + $0xc8] sm:$0xff]
    %v60 = vld [vmem:[%s1 + $0xd0] sm:$0xff]
    %v61 = vld [vmem:[%s1 + $0xd8] sm:$0xff]
    %v62 = vld [vmem:[%s1 + $0xe0] sm:$0xff]
    %v63 = vld [vmem:[%s1 + $0xe8] sm:$0xff]
    %v64 = vld [vmem:[%s1 + $0xf0] sm:$0xff]
    %v65 = vld [vmem:[%s1 + $0xf8] sm:$0xff]
    %v66 = vld [vmem:[%s1 + $0x100] sm:$0xff]
    %v67 = vld [vmem:[%s1 + $0x108] sm:$0xff]
    %v68 = vld [vmem:[%s1 + $0x110] sm:$0xff]
    %v69 = vld [vmem:[%s1 + $0x118] sm:$0xff]
    %v70 = vld [vmem:[%s1 + $0x120] sm:$0xff]
    %v71 = vld [vmem:[%s1 + $0x128] sm:$0xff]
    %v72 = vld [vmem:[%s1 + $0x130] sm:$0xff]
    %v73 = vld [vmem:[%s1 + $0x138] sm:$0xff]
    %v74 = vld [vmem:[%s1 + $0x140] sm:$0xff]
    %v75 = vld [vmem:[%s1 + $0x148] sm:$0xff]
    %v76 = vld [vmem:[%s1 + $0x150] sm:$0xff]
    %v77 = vld [vmem:[%s1 + $0x158] sm:$0xff]
    %v78 = vld [vmem:[%s1 + $0x160] sm:$0xff]
    %v79 = vld [vmem:[%s1 + $0x168] sm:$0xff]
    %v80 = vld [vmem:[%s1 + $0x170] sm:$0xff]
    %v81 = vld [vmem:[%s1 + $0x178] sm:$0xff]
    %v82 = vld [vmem:[%s1 + $0x180] sm:$0xff]
    %v83 = vld [vmem:[%s1 + $0x188] sm:$0xff]
    %v84 = vld [vmem:[%s2] sm:$0x1]
    %v86 = vlaneseq
    %v87 = vshrl.u32 %v86, 7
    %v88 = vsub.s32 0, %v87
    %v89 = vrot.slane %v84, %v88
    %v92 = vcombine.high %v33, %v33
    %v94 = vunpack.c.l.s4 1983009808
    %v95 = vunpack.c.0.s8 %v94
    %v96 = vlaneseq
    %v97 = vshrl.u32 %v96, 7
    %v98 = vsub.s32 %v95, %v97
    %v99 = vrot.slane %v33, %v98
    %v101 = vunpack.c.l.s4 1983009808
    %v102 = vunpack.c.0.s8 %v101
    %v103 = vlaneseq
    %v104 = vshrl.u32 %v103, 7
    %v105 = vsub.s32 %v102, %v104
    %v106 = vrot.slane %v92, %v105
    %v107 = vcombine.high %v99, %v99
    %v108 = vcombine.high %v106, %v106
    %vm112 = vcmask 130048
    %v113 = vsel %vm112, %v108, 0
    %115 = vmatprep.subr.mxu0 0.0
    %116 = vmatpush1.msra.mxu0 %v34
    %117 = vmatprep.subr.mxu0 0.0
    %118 = vmatpush1.msra.mxu0 %v35
    %119 = vmatprep.subr.mxu0 0.0
    %120 = vmatpush1.msra.mxu0 %v36
    %121 = vmatprep.subr.mxu0 0.0
    %122 = vmatpush1.msra.mxu0 %v37
    %123 = vmatprep.subr.mxu0 0.0
    %124 = vmatpush1.msra.mxu0 %v38
    %125 = vmatprep.subr.mxu0 0.0
    %126 = vmatpush1.msra.mxu0 %v39
    %127 = vmatprep.subr.mxu0 0.0
    %128 = vmatpush1.msra.mxu0 %v40
    %129 = vmatprep.subr.mxu0 0.0
    %130 = vmatpush1.msra.mxu0 %v41
    %131 = vmatprep.subr.mxu0 0.0
    %132 = vmatpush1.msra.mxu0 %v42
    %133 = vmatprep.subr.mxu0 0.0
    %134 = vmatpush1.msra.mxu0 %v43
    %135 = vmatprep.subr.mxu0 0.0
    %136 = vmatpush1.msra.mxu0 %v44
    %137 = vmatprep.subr.mxu0 0.0
    %138 = vmatpush1.msra.mxu0 %v45
    %139 = vmatprep.subr.mxu0 0.0
    %140 = vmatpush1.msra.mxu0 %v46
    %141 = vmatprep.subr.mxu0 0.0
    %142 = vmatpush1.msra.mxu0 %v47
    %143 = vmatprep.subr.mxu0 0.0
    %144 = vmatpush1.msra.mxu0 %v48
    %145 = vmatprep.subr.mxu0 0.0
    %146 = vmatpush1.msra.mxu0 %v49
    %147 = vmatprep.subr.mxu0 0.0
    %148 = vmatpush1.msra.mxu0 %v50
    %149 = vmatprep.subr.mxu0 0.0
    %150 = vmatpush1.msra.mxu0 %v51
    %151 = vmatprep.subr.mxu0 0.0
    %152 = vmatpush1.msra.mxu0 %v52
    %153 = vmatprep.subr.mxu0 0.0
    %154 = vmatpush1.msra.mxu0 %v53
    %155 = vmatprep.subr.mxu0 0.0
    %156 = vmatpush1.msra.mxu0 %v54
    %157 = vmatprep.subr.mxu0 0.0
    %158 = vmatpush1.msra.mxu0 %v55
    %159 = vmatprep.subr.mxu0 0.0
    %160 = vmatpush1.msra.mxu0 %v56
    %161 = vmatprep.subr.mxu0 0.0
    %162 = vmatpush1.msra.mxu0 %v57
    %163 = vmatprep.subr.mxu0 0.0
    %164 = vmatpush1.msra.mxu0 %v58
    %165 = vmatprep.subr.mxu0 0.0
    %166 = vmatpush1.msra.mxu0 %v59
    %167 = vmatprep.subr.mxu0 0.0
    %168 = vmatpush1.msra.mxu0 %v60
    %169 = vmatprep.subr.mxu0 0.0
    %170 = vmatpush1.msra.mxu0 %v61
    %171 = vmatprep.subr.mxu0 0.0
    %172 = vmatpush1.msra.mxu0 %v62
    %173 = vmatprep.subr.mxu0 0.0
    %174 = vmatpush1.msra.mxu0 %v63
    %175 = vmatprep.subr.mxu0 0.0
    %176 = vmatpush1.msra.mxu0 %v64
    %177 = vmatprep.subr.mxu0 0.0
    %178 = vmatpush1.msra.mxu0 %v65
    %179 = vmatprep.mubr.f32.mxu0 %v107
    %180 = vmatmul.mubr.f32.gmra.mrb[0].mxu0 %v99
    %v181 = vpop.f32.mrb[0].mxu0
    %v182 = vadd.f32 %v89, %v181
    %v183 = vpop.f32.mrb[0].mxu0
    %184 = vdwg.mxu0
    %185 = vmatprep.subr.mxu0 0.0
    %186 = vmatpush1.msra.mxu0 %v66
    %187 = vmatprep.subr.mxu0 0.0
    %188 = vmatpush1.msra.mxu0 %v67
    %189 = vmatprep.subr.mxu0 0.0
    %190 = vmatpush1.msra.mxu0 %v68
    %191 = vmatprep.subr.mxu0 0.0
    %192 = vmatpush1.msra.mxu0 %v69
    %193 = vmatprep.subr.mxu0 0.0
    %194 = vmatpush1.msra.mxu0 %v70
    %195 = vmatprep.subr.mxu0 0.0
    %196 = vmatpush1.msra.mxu0 %v71
    %197 = vmatprep.subr.mxu0 0.0
    %198 = vmatpush1.msra.mxu0 %v72
    %199 = vmatprep.subr.mxu0 0.0
    %200 = vmatpush1.msra.mxu0 %v73
    %201 = vmatprep.subr.mxu0 0.0
    %202 = vmatpush1.msra.mxu0 %v74
    %203 = vmatprep.subr.mxu0 0.0
    %204 = vmatpush1.msra.mxu0 %v75
    %205 = vmatprep.subr.mxu0 0.0
    %206 = vmatpush1.msra.mxu0 %v76
    %207 = vmatprep.subr.mxu0 0.0
    %208 = vmatpush1.msra.mxu0 %v77
    %209 = vmatprep.subr.mxu0 0.0
    %210 = vmatpush1.msra.mxu0 %v78
    %211 = vmatprep.subr.mxu0 0.0
    %212 = vmatpush1.msra.mxu0 %v79
    %213 = vmatprep.subr.mxu0 0.0
    %214 = vmatpush1.msra.mxu0 %v80
    %215 = vmatprep.subr.mxu0 0.0
    %216 = vmatpush1.msra.mxu0 %v81
    %217 = vmatprep.subr.mxu0 0.0
    %218 = vmatpush1.msra.mxu0 %v82
    %219 = vmatprep.subr.mxu0 0.0
    %220 = vmatpush1.msra.mxu0 %v83
    %221 = vmatprep.subr.mxu0 0.0
    %222 = vmatpush1.msra.mxu0 0.0
    %223 = vmatprep.subr.mxu0 0.0
    %224 = vmatpush1.msra.mxu0 0.0
    %225 = vmatprep.subr.mxu0 0.0
    %226 = vmatpush1.msra.mxu0 0.0
    %227 = vmatprep.subr.mxu0 0.0
    %228 = vmatpush1.msra.mxu0 0.0
    %229 = vmatprep.subr.mxu0 0.0
    %230 = vmatpush1.msra.mxu0 0.0
    %231 = vmatprep.subr.mxu0 0.0
    %232 = vmatpush1.msra.mxu0 0.0
    %233 = vmatprep.subr.mxu0 0.0
    %234 = vmatpush1.msra.mxu0 0.0
    %235 = vmatprep.subr.mxu0 0.0
    %236 = vmatpush1.msra.mxu0 0.0
    %237 = vmatprep.subr.mxu0 0.0
    %238 = vmatpush1.msra.mxu0 0.0
    %239 = vmatprep.subr.mxu0 0.0
    %240 = vmatpush1.msra.mxu0 0.0
    %241 = vmatprep.subr.mxu0 0.0
    %242 = vmatpush1.msra.mxu0 0.0
    %243 = vmatprep.subr.mxu0 0.0
    %244 = vmatpush1.msra.mxu0 0.0
    %245 = vmatprep.subr.mxu0 0.0
    %246 = vmatpush1.msra.mxu0 0.0
    %247 = vmatprep.subr.mxu0 0.0
    %248 = vmatpush1.msra.mxu0 0.0
    %249 = vmatprep.mubr.f32.mxu0 %v113
    %250 = vmatmul.mubr.f32.gmra.mrb[0].mxu0 %v106
    %v251 = vpop.f32.mrb[0].mxu0
    %v252 = vadd.f32 %v182, %v251
    %v253 = vpop.f32.mrb[0].mxu0
    %254 = vdwg.mxu0
    %v255 = vmax.f32 %v252, 0.0
    %v256 = vld [vmem:[%s3] sm:$0xff]
    %v257 = vld [vmem:[%s3 + $0x8] sm:$0xff]
    %v258 = vld [vmem:[%s3 + $0x10] sm:$0xff]
    %v259 = vld [vmem:[%s3 + $0x18] sm:$0xff]
    %v260 = vld [vmem:[%s3 + $0x20] sm:$0xff]
    %v261 = vld [vmem:[%s3 + $0x28] sm:$0xff]
    %v262 = vld [vmem:[%s3 + $0x30] sm:$0xff]
    %v263 = vld [vmem:[%s3 + $0x38] sm:$0xff]
    %v264 = vld [vmem:[%s3 + $0x40] sm:$0xff]
    %v265 = vld [vmem:[%s3 + $0x48] sm:$0xff]
    %v266 = vld [vmem:[%s3 + $0x50] sm:$0xff]
    %v267 = vld [vmem:[%s3 + $0x58] sm:$0xff]
    %v268 = vld [vmem:[%s3 + $0x60] sm:$0xff]
    %v269 = vld [vmem:[%s3 + $0x68] sm:$0xff]
    %v270 = vld [vmem:[%s3 + $0x70] sm:$0xff]
    %v271 = vld [vmem:[%s4] sm:$0x1]
    %v273 = vlaneseq
    %v274 = vshrl.u32 %v273, 7
    %v275 = vsub.s32 0, %v274
    %v276 = vrot.slane %v271, %v275
    %vm278 = vcmask 982016
    %v280 = vsel %vm278, %v255, 0
    %282 = vmatprep.subr.mxu0 0.0
    %283 = vmatpush1.msra.mxu0 %v256
    %284 = vmatprep.subr.mxu0 0.0
    %285 = vmatpush1.msra.mxu0 %v257
    %286 = vmatprep.subr.mxu0 0.0
    %287 = vmatpush1.msra.mxu0 %v258
    %288 = vmatprep.subr.mxu0 0.0
    %289 = vmatpush1.msra.mxu0 %v259
    %290 = vmatprep.subr.mxu0 0.0
    %291 = vmatpush1.msra.mxu0 %v260
    %292 = vmatprep.subr.mxu0 0.0
    %293 = vmatpush1.msra.mxu0 %v261
    %294 = vmatprep.subr.mxu0 0.0
    %295 = vmatpush1.msra.mxu0 %v262
    %296 = vmatprep.subr.mxu0 0.0
    %297 = vmatpush1.msra.mxu0 %v263
    %298 = vmatprep.subr.mxu0 0.0
    %299 = vmatpush1.msra.mxu0 %v264
    %300 = vmatprep.subr.mxu0 0.0
    %301 = vmatpush1.msra.mxu0 %v265
    %302 = vmatprep.subr.mxu0 0.0
    %303 = vmatpush1.msra.mxu0 %v266
    %304 = vmatprep.subr.mxu0 0.0
    %305 = vmatpush1.msra.mxu0 %v267
    %306 = vmatprep.subr.mxu0 0.0
    %307 = vmatpush1.msra.mxu0 %v268
    %308 = vmatprep.subr.mxu0 0.0
    %309 = vmatpush1.msra.mxu0 %v269
    %310 = vmatprep.subr.mxu0 0.0
    %311 = vmatpush1.msra.mxu0 %v270
    %312 = vmatprep.subr.mxu0 0.0
    %313 = vmatpush1.msra.mxu0 0.0
    %314 = vmatprep.subr.mxu0 0.0
    %315 = vmatpush1.msra.mxu0 0.0
    %316 = vmatprep.subr.mxu0 0.0
    %317 = vmatpush1.msra.mxu0 0.0
    %318 = vmatprep.subr.mxu0 0.0
    %319 = vmatpush1.msra.mxu0 0.0
    %320 = vmatprep.subr.mxu0 0.0
    %321 = vmatpush1.msra.mxu0 0.0
    %322 = vmatprep.subr.mxu0 0.0
    %323 = vmatpush1.msra.mxu0 0.0
    %324 = vmatprep.subr.mxu0 0.0
    %325 = vmatpush1.msra.mxu0 0.0
    %326 = vmatprep.subr.mxu0 0.0
    %327 = vmatpush1.msra.mxu0 0.0
    %328 = vmatprep.subr.mxu0 0.0
    %329 = vmatpush1.msra.mxu0 0.0
    %330 = vmatprep.subr.mxu0 0.0
    %331 = vmatpush1.msra.mxu0 0.0
    %332 = vmatprep.subr.mxu0 0.0
    %333 = vmatpush1.msra.mxu0 0.0
    %334 = vmatprep.subr.mxu0 0.0
    %335 = vmatpush1.msra.mxu0 0.0
    %336 = vmatprep.subr.mxu0 0.0
    %337 = vmatpush1.msra.mxu0 0.0
    %338 = vmatprep.subr.mxu0 0.0
    %339 = vmatpush1.msra.mxu0 0.0
    %340 = vmatprep.subr.mxu0 0.0
    %341 = vmatpush1.msra.mxu0 0.0
    %342 = vmatprep.subr.mxu0 0.0
    %343 = vmatpush1.msra.mxu0 0.0
    %344 = vmatprep.subr.mxu0 0.0
    %345 = vmatpush1.msra.mxu0 0.0
    %346 = vmatprep.mubr.f32.mxu0 0.0
    %347 = vmatmul.mubr.f32.gmra.mrb[0].mxu0 %v280
    %v348 = vpop.f32.mrb[0].mxu0
    %v349 = vadd.f32 %v276, %v348
    %v350 = vpop.f32.mrb[0].mxu0
    %351 = vdwg.mxu0
    %v352 = vmax.f32 %v349, 0.0
    %v353 = vld [vmem:[%s5] sm:$0xff]
    %v354 = vld [vmem:[%s5 + $0x8] sm:$0xff]
    %v355 = vld [vmem:[%s5 + $0x10] sm:$0xff]
    %v356 = vld [vmem:[%s5 + $0x18] sm:$0xff]
    %v357 = vld [vmem:[%s5 + $0x20] sm:$0xff]
    %v358 = vld [vmem:[%s5 + $0x28] sm:$0xff]
    %v359 = vld [vmem:[%s5 + $0x30] sm:$0xff]
    %v360 = vld [vmem:[%s5 + $0x38] sm:$0xff]
    %v361 = vld [vmem:[%s5 + $0x40] sm:$0xff]
    %v362 = vld [vmem:[%s5 + $0x48] sm:$0xff]
    %v363 = vld [vmem:[%s5 + $0x50] sm:$0xf]
    %v364 = vld [vmem:[%s6] sm:$0x1]
    %v366 = vlaneseq
    %v367 = vshrl.u32 %v366, 7
    %v368 = vsub.s32 0, %v367
    %v369 = vrot.slane %v364, %v368
    %vm371 = vcmask 687104
    %v373 = vsel %vm371, %v352, 0
    %vm375 = vcmask 1043456
    %v377 = vsel %vm375, %v363, 0
    %379 = vmatprep.subr.mxu0 0.0
    %380 = vmatpush1.msra.mxu0 %v353
    %381 = vmatprep.subr.mxu0 0.0
    %382 = vmatpush1.msra.mxu0 %v354
    %383 = vmatprep.subr.mxu0 0.0
    %384 = vmatpush1.msra.mxu0 %v355
    %385 = vmatprep.subr.mxu0 0.0
    %386 = vmatpush1.msra.mxu0 %v356
    %387 = vmatprep.subr.mxu0 0.0
    %388 = vmatpush1.msra.mxu0 %v357
    %389 = vmatprep.subr.mxu0 0.0
    %390 = vmatpush1.msra.mxu0 %v358
    %391 = vmatprep.subr.mxu0 0.0
    %392 = vmatpush1.msra.mxu0 %v359
    %393 = vmatprep.subr.mxu0 0.0
    %394 = vmatpush1.msra.mxu0 %v360
    %395 = vmatprep.subr.mxu0 0.0
    %396 = vmatpush1.msra.mxu0 %v361
    %397 = vmatprep.subr.mxu0 0.0
    %398 = vmatpush1.msra.mxu0 %v362
    %399 = vmatprep.subr.mxu0 0.0
    %400 = vmatpush1.msra.mxu0 %v377
    %401 = vmatprep.subr.mxu0 0.0
    %402 = vmatpush1.msra.mxu0 0.0
    %403 = vmatprep.subr.mxu0 0.0
    %404 = vmatpush1.msra.mxu0 0.0
    %405 = vmatprep.subr.mxu0 0.0
    %406 = vmatpush1.msra.mxu0 0.0
    %407 = vmatprep.subr.mxu0 0.0
    %408 = vmatpush1.msra.mxu0 0.0
    %409 = vmatprep.subr.mxu0 0.0
    %410 = vmatpush1.msra.mxu0 0.0
    %411 = vmatprep.subr.mxu0 0.0
    %412 = vmatpush1.msra.mxu0 0.0
    %413 = vmatprep.subr.mxu0 0.0
    %414 = vmatpush1.msra.mxu0 0.0
    %415 = vmatprep.subr.mxu0 0.0
    %416 = vmatpush1.msra.mxu0 0.0
    %417 = vmatprep.subr.mxu0 0.0
    %418 = vmatpush1.msra.mxu0 0.0
    %419 = vmatprep.subr.mxu0 0.0
    %420 = vmatpush1.msra.mxu0 0.0
    %421 = vmatprep.subr.mxu0 0.0
    %422 = vmatpush1.msra.mxu0 0.0
    %423 = vmatprep.subr.mxu0 0.0
    %424 = vmatpush1.msra.mxu0 0.0
    %425 = vmatprep.subr.mxu0 0.0
    %426 = vmatpush1.msra.mxu0 0.0
    %427 = vmatprep.subr.mxu0 0.0
    %428 = vmatpush1.msra.mxu0 0.0
    %429 = vmatprep.subr.mxu0 0.0
    %430 = vmatpush1.msra.mxu0 0.0
    %431 = vmatprep.subr.mxu0 0.0
    %432 = vmatpush1.msra.mxu0 0.0
    %433 = vmatprep.subr.mxu0 0.0
    %434 = vmatpush1.msra.mxu0 0.0
    %435 = vmatprep.subr.mxu0 0.0
    %436 = vmatpush1.msra.mxu0 0.0
    %437 = vmatprep.subr.mxu0 0.0
    %438 = vmatpush1.msra.mxu0 0.0
    %439 = vmatprep.subr.mxu0 0.0
    %440 = vmatpush1.msra.mxu0 0.0
    %441 = vmatprep.subr.mxu0 0.0
    %442 = vmatpush1.msra.mxu0 0.0
    %443 = vmatprep.mubr.f32.mxu0 0.0
    %444 = vmatmul.mubr.f32.gmra.mrb[0].mxu0 %v373
    %v445 = vpop.f32.mrb[0].mxu0
    %v446 = vadd.f32 %v369, %v445
    %v447 = vpop.f32.mrb[0].mxu0
    %448 = vdwg.mxu0
    %v449 = vmax.f32 %v446, 0.0
    %v450 = vld [vmem:[%s7] sm:$0xff]
    %v451 = vld [vmem:[%s7 + $0x8] sm:$0xff]
    %v452 = vld [vmem:[%s7 + $0x10] sm:$0xff]
    %v453 = vld [vmem:[%s7 + $0x18] sm:$0x1]
    %v454 = vld [vmem:[%s8] sm:$0x1]
    %v456 = vlaneseq
    %v457 = vshrl.u32 %v456, 7
    %v458 = vsub.s32 0, %v457
    %v459 = vrot.slane %v454, %v458
    %vm461 = vcmask 203776
    %v463 = vsel %vm461, %v449, 0
    %vm465 = vcmask 1040384
    %v467 = vsel %vm465, %v453, 0
    %469 = vmatprep.subr.mxu0 0.0
    %470 = vmatpush1.msra.mxu0 %v450
    %471 = vmatprep.subr.mxu0 0.0
    %472 = vmatpush1.msra.mxu0 %v451
    %473 = vmatprep.subr.mxu0 0.0
    %474 = vmatpush1.msra.mxu0 %v452
    %475 = vmatprep.subr.mxu0 0.0
    %476 = vmatpush1.msra.mxu0 %v467
    %477 = vmatprep.subr.mxu0 0.0
    %478 = vmatpush1.msra.mxu0 0.0
    %479 = vmatprep.subr.mxu0 0.0
    %480 = vmatpush1.msra.mxu0 0.0
    %481 = vmatprep.subr.mxu0 0.0
    %482 = vmatpush1.msra.mxu0 0.0
    %483 = vmatprep.subr.mxu0 0.0
    %484 = vmatpush1.msra.mxu0 0.0
    %485 = vmatprep.subr.mxu0 0.0
    %486 = vmatpush1.msra.mxu0 0.0
    %487 = vmatprep.subr.mxu0 0.0
    %488 = vmatpush1.msra.mxu0 0.0
    %489 = vmatprep.subr.mxu0 0.0
    %490 = vmatpush1.msra.mxu0 0.0
    %491 = vmatprep.subr.mxu0 0.0
    %492 = vmatpush1.msra.mxu0 0.0
    %493 = vmatprep.subr.mxu0 0.0
    %494 = vmatpush1.msra.mxu0 0.0
    %495 = vmatprep.subr.mxu0 0.0
    %496 = vmatpush1.msra.mxu0 0.0
    %497 = vmatprep.subr.mxu0 0.0
    %498 = vmatpush1.msra.mxu0 0.0
    %499 = vmatprep.subr.mxu0 0.0
    %500 = vmatpush1.msra.mxu0 0.0
    %501 = vmatprep.subr.mxu0 0.0
    %502 = vmatpush1.msra.mxu0 0.0
    %503 = vmatprep.subr.mxu0 0.0
    %504 = vmatpush1.msra.mxu0 0.0
    %505 = vmatprep.subr.mxu0 0.0
    %506 = vmatpush1.msra.mxu0 0.0
    %507 = vmatprep.subr.mxu0 0.0
    %508 = vmatpush1.msra.mxu0 0.0
    %509 = vmatprep.subr.mxu0 0.0
    %510 = vmatpush1.msra.mxu0 0.0
    %511 = vmatprep.subr.mxu0 0.0
    %512 = vmatpush1.msra.mxu0 0.0
    %513 = vmatprep.subr.mxu0 0.0
    %514 = vmatpush1.msra.mxu0 0.0
    %515 = vmatprep.subr.mxu0 0.0
    %516 = vmatpush1.msra.mxu0 0.0
    %517 = vmatprep.subr.mxu0 0.0
    %518 = vmatpush1.msra.mxu0 0.0
    %519 = vmatprep.subr.mxu0 0.0
    %520 = vmatpush1.msra.mxu0 0.0
    %521 = vmatprep.subr.mxu0 0.0
    %522 = vmatpush1.msra.mxu0 0.0
    %523 = vmatprep.subr.mxu0 0.0
    %524 = vmatpush1.msra.mxu0 0.0
    %525 = vmatprep.subr.mxu0 0.0
    %526 = vmatpush1.msra.mxu0 0.0
    %527 = vmatprep.subr.mxu0 0.0
    %528 = vmatpush1.msra.mxu0 0.0
    %529 = vmatprep.subr.mxu0 0.0
    %530 = vmatpush1.msra.mxu0 0.0
    %531 = vmatprep.subr.mxu0 0.0
    %532 = vmatpush1.msra.mxu0 0.0
    %533 = vmatprep.mubr.f32.mxu0 0.0
    %534 = vmatmul.mubr.f32.gmra.mrb[0].mxu0 %v463
    %v535 = vpop.f32.mrb[0].mxu0
    %v536 = vadd.f32 %v459, %v535
    %v537 = vpop.f32.mrb[0].mxu0
    %538 = vdwg.mxu0
    %vm539 = vcmask 9216
    %540 = vst.msk [vmem:[#allocation2] sm:$0x3] %vm539, %v536
    // Predicated region
    $region38: #{lenet_cifar_forward.5} parent=1 // pred_check
      _
    $region39: #{lenet_cifar_forward.5} parent=1 // pred_check_branch
      %542 = sbr.rel (0) target = $region41
    $region40: #{lenet_cifar_forward.5} parent=1 // pred_region
      %s544 = ssub.s32 32, 32
      %545 = vsyncadd [#allocation3], %s544
      %s547 = sshll.u32 [#allocation2], 4
      %s548 = int_to_ptr.vmem [resolvable:$true] %s547
      %550 = dma.vmem_to_hbm [thread:$0]  %s548, 32, %s9, [#allocation3]
    $region41: #{lenet_cifar_forward.5} parent=1 // pred_fallthru
      _
    // Predicated region
    $region42: #{lenet_cifar_forward.5} parent=1 // pred_check
      _
    $region43: #{lenet_cifar_forward.5} parent=1 // pred_check_branch
      %552 = sbr.rel (0) target = $region45
    $region44: #{lenet_cifar_forward.5} parent=1 // pred_region
      %553 = dma.done [#allocation3], 32
    $region45: #{lenet_cifar_forward.5} parent=1 // pred_fallthru
      _
    %554 = vsyncpa [#allocation3], 1

</llo_original>
